<compile_context>
chip_gen: v7x
topology: tpu7x:2x2x1
jax: 0.10.0
libtpu: 0.0.40
codegen_flags: <defaults>
</compile_context>

<pallas_src>
import functools
import math

import jax
import jax.numpy as jnp
from jax.experimental import pallas as pl
from jax.experimental.pallas import tpu as pltpu

# ----------------------------- config ------------------------------------------------
WIDTH_DIV = 16            # scale-down factor for resnet50 channel widths
BASE = 64 // WIDTH_DIV    # stem / layer1 planes (real model: 64)
EXPANSION = 4             # bottleneck expansion
BLOCKS = (3, 4, 6, 3)     # resnet50 block counts
BINS = (1, 2, 3, 6)
NUM_CLASS = 1
FC_WIDTH = 512            # hardcoded in the module
BN_EPS = 1e-5
LANE = 128                # channel padding granularity (lane width)


def _round_up(x, m):
    return (x + m - 1) // m * m


def _pad128(c):
    return _round_up(c, LANE)


def _pick_tm(m):
    """Large M-tiles (few grid steps) but keep >=2 blocks on the parallel axis when M >= 256
    so v7x's two TensorCores both get work."""
    if m <= 256:
        return m
    for t in (1024, 768, 512, 384, 256, 128, 64, 32, 16, 8):
        if m % t == 0 and m // t >= 2:
            return t
    return m


def _vmem_limit(est_bytes):
    """Raise the scoped VMEM limit only when the chosen blocks need it (cap at v7x's 64 MiB)."""
    if est_bytes <= (24 << 20):
        return None
    return min(64 << 20, _round_up(est_bytes + (4 << 20), 1 << 20))


# ----------------------------- Pallas kernels ----------------------------------------
def gemm_bias_kernel(a_ref, b_ref, c_ref, o_ref, *, relu):
    """o = relu?( A @ B + bias ) — conv-as-GEMM with BN scale pre-folded into B."""
    acc = jnp.dot(a_ref[...], b_ref[...], preferred_element_type=jnp.float32)
    y = acc + c_ref[...]
    if relu:
        y = jnp.maximum(y, 0.0)
    o_ref[...] = y.astype(o_ref.dtype)


def gemm_bias_res_kernel(a_ref, b_ref, c_ref, r_ref, o_ref):
    """o = relu( A @ B + bias + residual ) — bottleneck conv3 with fused residual add."""
    acc = jnp.dot(a_ref[...], b_ref[...], preferred_element_type=jnp.float32)
    y = acc + c_ref[...] + r_ref[...].astype(jnp.float32)
    o_ref[...] = jnp.maximum(y, 0.0).astype(o_ref.dtype)


def direct_conv_kernel(x_ref, w_ref, c_ref, o_ref, *, kh, kw, dil, stride, relu, row_block):
    """KxK conv (any stride, via phase images) for one image / one cout tile, no im2col in HBM.

    x_ref: (1, stride*stride, Hq, Wq, Cin) phase-decomposed padded activation
           (phase p = pi*stride + pj holds xp[pi::stride, pj::stride]),
    w_ref: (kh*kw, Cin, tn), c_ref: (1, tn) bias, o_ref: (1, Ho, Wo, tn).

    The output is processed in row blocks so the f32 accumulator stays small (register
    resident) instead of one (Ho*Wo, tn) accumulator that spills to VMEM.
    """
    _, ho, wo, tn = o_ref.shape
    cin = x_ref.shape[-1]
    s = stride
    bias = c_ref[...]
    for r0 in range(0, ho, row_block):
        rb = min(row_block, ho - r0)
        acc = None
        t = 0
        for i in range(kh):
            for j in range(kw):
                ri, cj = i * dil, j * dil
                ph = (ri % s) * s + (cj % s)
                rr = ri // s + r0
                cc = cj // s
                patch = x_ref[0, ph, rr:rr + rb, cc:cc + wo, :]
                d = jnp.dot(patch.reshape(rb * wo, cin), w_ref[t],
                            preferred_element_type=jnp.float32)
                acc = d if acc is None else acc + d
                t += 1
        y = acc + bias
        if relu:
            y = jnp.maximum(y, 0.0)
        o_ref[0, r0:r0 + rb, :, :] = y.reshape(rb, wo, tn).astype(o_ref.dtype)


# ----------------------------- kernel wrappers ----------------------------------------
@functools.partial(jax.jit, static_argnames=("relu",))
def gemm_bias_act(lhs, rhs, bias, residual, *, relu):
    """lhs: (M, K) bf16, rhs: (K, N) bf16 (BN-scale folded), bias: (N,) f32, residual opt (M, N)."""
    M, K = lhs.shape
    _, N = rhs.shape
    bias2 = bias.reshape(1, N).astype(jnp.float32)
    tm = _pick_tm(M)
    has_res = residual is not None

    if K * N * 2 <= (4 << 20):
        # Weight (and bias) small enough to keep fully VMEM-resident: single block with a
        # constant index_map -> DMA'd once per call, grid only over M.
        tn = N
        grid = (M // tm,)
        a_spec = pl.BlockSpec((tm, K), lambda i: (i, 0))
        b_spec = pl.BlockSpec((K, N), lambda i: (0, 0))
        c_spec = pl.BlockSpec((1, N), lambda i: (0, 0))
        o_spec = pl.BlockSpec((tm, N), lambda i: (i, 0))
        r_spec = pl.BlockSpec((tm, N), lambda i: (i, 0))
        sem = ("parallel",)
    else:
        # Wide-N fallback: 256-wide output tiles (v6e/v7x MXU N width), weight block index
        # constant along the inner M axis so it is not re-fetched every step.
        tn = 256 if N % 256 == 0 else LANE
        grid = (N // tn, M // tm)
        a_spec = pl.BlockSpec((tm, K), lambda n, m: (m, 0))
        b_spec = pl.BlockSpec((K, tn), lambda n, m: (0, n))
        c_spec = pl.BlockSpec((1, tn), lambda n, m: (0, n))
        o_spec = pl.BlockSpec((tm, tn), lambda n, m: (m, n))
        r_spec = pl.BlockSpec((tm, tn), lambda n, m: (m, n))
        sem = ("parallel", "parallel")

    est = 2 * 2 * (tm * K + K * tn + tm * tn + (tm * tn if has_res else 0)) + 8 * tn
    cparams = pltpu.CompilerParams(dimension_semantics=sem,
                                   vmem_limit_bytes=_vmem_limit(est))
    if not has_res:
        return pl.pallas_call(
            functools.partial(gemm_bias_kernel, relu=relu),
            out_shape=jax.ShapeDtypeStruct((M, N), lhs.dtype),
            grid=grid,
            in_specs=[a_spec, b_spec, c_spec],
            out_specs=o_spec,
            compiler_params=cparams,
        )(lhs, rhs, bias2)
    return pl.pallas_call(
        gemm_bias_res_kernel,
        out_shape=jax.ShapeDtypeStruct((M, N), lhs.dtype),
        grid=grid,
        in_specs=[a_spec, b_spec, c_spec, r_spec],
        out_specs=o_spec,
        compiler_params=cparams,
    )(lhs, rhs, bias2, residual)


@functools.partial(jax.jit,
                   static_argnames=("kh", "kw", "dilation", "stride", "relu", "ho", "wo"))
def direct_conv_call(xph, wt, bias, *, kh, kw, dilation, stride, relu, ho, wo):
    """xph: (B, s*s, Hq, Wq, Cin) phase-decomposed padded activation (bf16),
    wt: (kh*kw, Cin, Cout) bf16, bias: (Cout,) f32."""
    B, nph, Hq, Wq, cin = xph.shape
    cout = wt.shape[-1]
    tn = 256 if cout % 256 == 0 else cout
    bias2 = bias.reshape(1, cout).astype(jnp.float32)

    # Row-block so the f32 accumulator stays <= ~64 KiB (register resident).
    row_block = ho
    while row_block % 2 == 0 and row_block * wo > 128:
        row_block //= 2

    est = 2 * 2 * (nph * Hq * Wq * cin + kh * kw * cin * tn + ho * wo * tn) + 8 * tn
    kern = functools.partial(direct_conv_kernel, kh=kh, kw=kw, dil=dilation,
                             stride=stride, relu=relu, row_block=row_block)
    # TODO(synk): at real PSPNet resolutions the whole-image x block should be H-tiled (halo)
    #             to fit v7x's 64 MiB VMEM; at the toy sizes here it is a few hundred KiB.
    return pl.pallas_call(
        kern,
        out_shape=jax.ShapeDtypeStruct((B, ho, wo, cout), xph.dtype),
        grid=(B, cout // tn),
        in_specs=[
            pl.BlockSpec((1, nph, Hq, Wq, cin), lambda b, n: (b, 0, 0, 0, 0)),
            pl.BlockSpec((kh * kw, cin, tn), lambda b, n: (0, 0, n)),
            pl.BlockSpec((1, tn), lambda b, n: (0, n)),
        ],
        out_specs=pl.BlockSpec((1, ho, wo, tn), lambda b, n: (b, 0, 0, n)),
        compiler_params=pltpu.CompilerParams(
            dimension_semantics=("parallel", "parallel"),
            vmem_limit_bytes=_vmem_limit(est)),
    )(xph, wt, bias2)


# ----------------------------- conv front-ends ----------------------------------------
def conv1x1(x, params, *, relu, residual=None, stride=1):
    w, bias = params                               # w: (1, 1, Cin_pad, Cout_pad) bf16
    if stride > 1:
        x = x[:, ::stride, ::stride, :]            # 1x1 conv with stride == subsample
    B, H, W, C = x.shape
    cout = w.shape[-1]
    M = B * H * W
    lhs = x.reshape(M, C)
    rhs = w.reshape(C, cout)
    if M < LANE:
        # Tiny-M (PSP pooled branches, M <= 72): a pallas_call here is pure launch/step
        # overhead with an almost-empty MXU — let XLA do the small matmul.
        y = jnp.dot(lhs, rhs, preferred_element_type=jnp.float32) + bias.astype(jnp.float32)
        if residual is not None:
            y = y + residual.reshape(M, cout).astype(jnp.float32)
        if relu:
            y = jnp.maximum(y, 0.0)
        out = y.astype(x.dtype)
    else:
        res = None if residual is None else residual.reshape(M, cout)
        out = gemm_bias_act(lhs, rhs, bias, res, relu=relu)
    return out.reshape(B, H, W, cout)


def conv_spatial_direct(x, params, *, padding, dilation, stride=1, relu=True):
    """KxK conv (stride 1 or 2+) via the direct tap-accumulating Pallas kernel.

    For stride > 1 the padded input is phase-decomposed in plain JAX (1x data movement) so
    every tap inside the kernel is a contiguous stride-1 slice of one phase image.
    """
    w, bias = params                               # w: (kh, kw, Cin_pad, Cout_pad)
    kh, kw, cin, cout = w.shape
    B, H, W, _ = x.shape
    s = stride
    ho = (H + 2 * padding - dilation * (kh - 1) - 1) // s + 1
    wo = (W + 2 * padding - dilation * (kw - 1) - 1) // s + 1
    xp = jnp.pad(x, ((0, 0), (padding, padding), (padding, padding), (0, 0)))
    Hp, Wp = xp.shape[1], xp.shape[2]
    Hq = max(-(-Hp // s), ho + (dilation * (kh - 1)) // s)
    Wq = max(-(-Wp // s), wo + (dilation * (kw - 1)) // s)
    xp = jnp.pad(xp, ((0, 0), (0, s * Hq - Hp), (0, s * Wq - Wp), (0, 0)))
    xph = (xp.reshape(B, Hq, s, Wq, s, cin)
             .transpose(0, 2, 4, 1, 3, 5)
             .reshape(B, s * s, Hq, Wq, cin))
    wt = w.reshape(kh * kw, cin, cout)
    return direct_conv_call(xph, wt, bias, kh=kh, kw=kw, dilation=dilation,
                            stride=s, relu=relu, ho=ho, wo=wo)


def im2col(x, kh, kw, stride, padding, dilation):
    """x: (B, H, W, C) -> (B*Ho*Wo, kh*kw*C) patches, ordering (kh, kw, C)."""
    B, H, W, C = x.shape
    Ho = (H + 2 * padding - dilation * (kh - 1) - 1) // stride + 1
    Wo = (W + 2 * padding - dilation * (kw - 1) - 1) // stride + 1
    xp = jnp.pad(x, ((0, 0), (padding, padding), (padding, padding), (0, 0)))
    taps = []
    for i in range(kh):
        for j in range(kw):
            r0, c0 = i * dilation, j * dilation
            taps.append(
                xp[:, r0:r0 + stride * (Ho - 1) + 1:stride,
                      c0:c0 + stride * (Wo - 1) + 1:stride, :])
    patches = jnp.stack(taps, axis=3)              # (B, Ho, Wo, kh*kw, C)
    return patches.reshape(B * Ho * Wo, kh * kw * C), (B, Ho, Wo)


def conv_spatial_im2col(x, params, *, stride, padding, dilation, relu=True):
    """Only used for the 7x7 stem (cin=3); K is zero-padded to a lane multiple (147 -> 256)."""
    w, bias = params
    kh, kw, cin, cout = w.shape
    lhs, (B, Ho, Wo) = im2col(x, kh, kw, stride, padding, dilation)
    K = kh * kw * cin
    Kp = _pad128(K)
    rhs = w.reshape(K, cout)
    if Kp != K:
        lhs = jnp.pad(lhs, ((0, 0), (0, Kp - K)))
        rhs = jnp.pad(rhs, ((0, Kp - K), (0, 0)))
    out = gemm_bias_act(lhs, rhs, bias, None, relu=relu)
    return out.reshape(B, Ho, Wo, cout)


# ----------------------------- plain-JAX glue ------------------------------------------
def max_pool_3x3_s2_p1(x):
    # PyTorch MaxPool2d(3, stride=2, padding=1): implicit -inf padding, floor mode.
    neg = jnp.asarray(-jnp.inf, dtype=x.dtype)
    return jax.lax.reduce_window(
        x, neg, jax.lax.max,
        window_dimensions=(1, 3, 3, 1), window_strides=(1, 2, 2, 1),
        padding=((0, 0), (1, 1), (1, 1), (0, 0)))


def adaptive_avg_pool(x, out_size):
    """PyTorch AdaptiveAvgPool2d semantics (floor/ceil window bounds)."""
    B, H, W, C = x.shape

    def bounds(n_in, n_out):
        return [(math.floor(i * n_in / n_out), math.ceil((i + 1) * n_in / n_out))
                for i in range(n_out)]

    rows, cols = bounds(H, out_size), bounds(W, out_size)
    out_rows = []
    for rs, re in rows:
        out_cols = [x[:, rs:re, cs:ce, :].astype(jnp.float32).mean(axis=(1, 2))
                    for cs, ce in cols]
        out_rows.append(jnp.stack(out_cols, axis=1))
    return jnp.stack(out_rows, axis=1).astype(x.dtype)   # (B, out, out, C)


def bilinear_resize(x, out_h, out_w):
    """F.interpolate(mode='bilinear', align_corners=False) semantics, NHWC."""
    B, H, W, C = x.shape
    if H == out_h and W == out_w:
        return x
    dtype = x.dtype
    xf = x.astype(jnp.float32)

    def coords(n_out, n_in):
        scale = n_in / n_out
        s = jnp.maximum((jnp.arange(n_out, dtype=jnp.float32) + 0.5) * scale - 0.5, 0.0)
        i0 = jnp.floor(s)
        frac = s - i0
        i0 = jnp.minimum(i0.astype(jnp.int32), n_in - 1)
        i1 = jnp.minimum(i0 + 1, n_in - 1)
        return i0, i1, frac

    y0, y1, fy = coords(out_h, H)
    x0, x1, fx = coords(out_w, W)
    fx_ = fx[None, None, :, None]
    fy_ = fy[None, :, None, None]
    row0 = xf[:, y0]
    row1 = xf[:, y1]
    top = row0[:, :, x0] * (1.0 - fx_) + row0[:, :, x1] * fx_
    bot = row1[:, :, x0] * (1.0 - fx_) + row1[:, :, x1] * fx_
    out = top * (1.0 - fy_) + bot * fy_
    return out.astype(dtype)


# ----------------------------- parameter init ----------------------------------------
def conv_params(key, kh, kw, cin_pad, cout, cout_pad, bn=True, bias=False):
    """Generate weights over the padded cin, fold eval-mode BN scale into the weights,
    zero-pad the cout dim (zero weight columns + zero bias keep padded channels == 0)."""
    k1, k2, k3, k4, k5, k6 = jax.random.split(key, 6)
    w = jax.random.normal(k1, (kh, kw, cin_pad, cout), jnp.float32) / math.sqrt(kh * kw * cin_pad)
    if bn:
        gamma = 1.0 + 0.1 * jax.random.normal(k2, (cout,), jnp.float32)
        beta = 0.1 * jax.random.normal(k3, (cout,), jnp.float32)
        mean = 0.1 * jax.random.normal(k4, (cout,), jnp.float32)
        var = jnp.abs(jax.random.normal(k5, (cout,), jnp.float32)) + 0.5
        scale = gamma / jnp.sqrt(var + BN_EPS)
        shift = beta - mean * scale
    elif bias:
        scale = jnp.ones((cout,), jnp.float32)
        shift = 0.1 * jax.random.normal(k6, (cout,), jnp.float32)
    else:
        scale = jnp.ones((cout,), jnp.float32)
        shift = jnp.zeros((cout,), jnp.float32)
    w = w * scale                                            # fold BN scale -> epilogue is +bias
    w = jnp.pad(w, ((0, 0), (0, 0), (0, 0), (0, cout_pad - cout)))
    shift = jnp.pad(shift, (0, cout_pad - cout))
    return w.astype(jnp.bfloat16), shift.astype(jnp.float32)


def make_bottleneck_params(key, cin, planes, has_downsample):
    keys = jax.random.split(key, 4)
    cin_p, mid_p, out_p = _pad128(cin), _pad128(planes), _pad128(planes * EXPANSION)
    p = {
        "conv1": conv_params(keys[0], 1, 1, cin_p, planes, mid_p),
        "conv2": conv_params(keys[1], 3, 3, mid_p, planes, mid_p),
        "conv3": conv_params(keys[2], 1, 1, mid_p, planes * EXPANSION, out_p),
    }
    if has_downsample:
        p["down"] = conv_params(keys[3], 1, 1, cin_p, planes * EXPANSION, out_p)
    return p


def init_params(key):
    keys = iter(jax.random.split(key, 16))
    params = {"stem": conv_params(next(keys), 7, 7, 3, BASE, _pad128(BASE))}
    cin = BASE
    stages = []
    for planes, blocks in zip((BASE, BASE * 2, BASE * 4, BASE * 8), BLOCKS):
        bkeys = jax.random.split(next(keys), blocks)
        layer = []
        for b in range(blocks):
            in_ch = cin if b == 0 else planes * EXPANSION
            layer.append(make_bottleneck_params(bkeys[b], in_ch, planes, has_downsample=(b == 0)))
        cin = planes * EXPANSION
        stages.append(layer)
    params["layer1"], params["layer2"], params["layer3"], params["layer4"] = stages
    latent = cin                                             # backbone output channels
    branch = latent // len(BINS)
    pkeys = jax.random.split(next(keys), len(BINS))
    params["psp"] = [conv_params(pkeys[i], 1, 1, _pad128(latent), branch, _pad128(branch))
                     for i in range(len(BINS))]
    concat_pad = _pad128(latent) + len(BINS) * _pad128(branch)
    params["fc1"] = conv_params(next(keys), 3, 3, concat_pad, FC_WIDTH, _pad128(FC_WIDTH))
    params["fc2"] = conv_params(next(keys), 1, 1, _pad128(FC_WIDTH), NUM_CLASS, _pad128(NUM_CLASS),
                                bn=False, bias=True)
    return params, latent


# ----------------------------- forward pass ------------------------------------------
def bottleneck_forward(x, p, *, stride, dilation):
    y = conv1x1(x, p["conv1"], relu=True)
    # conv2: dilated/strided per the PspNet.load_backbone modification (direct conv, no im2col)
    y = conv_spatial_direct(y, p["conv2"], padding=dilation, dilation=dilation,
                            stride=stride, relu=True)
    if "down" in p:
        identity = conv1x1(x, p["down"], relu=False, stride=stride)
    else:
        identity = x
    # conv3 (1x1) with the residual add + ReLU fused into the GEMM epilogue
    return conv1x1(y, p["conv3"], relu=True, residual=identity)


def layer_forward(x, layer_params, *, first_stride, dilation):
    for b, p in enumerate(layer_params):
        x = bottleneck_forward(x, p, stride=first_stride if b == 0 else 1, dilation=dilation)
    return x


def psp_forward(x, psp_params):
    B, H, W, _ = x.shape
    outs = [x]
    for p, bin_size in zip(psp_params, BINS):
        y = adaptive_avg_pool(x, bin_size)
        y = conv1x1(y, p, relu=True)      # tiny-M: handled in plain jnp inside conv1x1
        y = bilinear_resize(y, H, W)
        outs.append(y)
    return jnp.concatenate(outs, axis=-1)


def pspnet_forward(x_nchw, params):
    x = jnp.transpose(x_nchw, (0, 2, 3, 1)).astype(jnp.bfloat16)   # NCHW -> NHWC, bf16
    H_in, W_in = x.shape[1], x.shape[2]

    # resnet50 stem (7x7/s2 im2col with K padded 147->256)
    y = conv_spatial_im2col(x, params["stem"], stride=2, padding=3, dilation=1, relu=True)
    y = max_pool_3x3_s2_p1(y)
    # layer1/layer2 vanilla, layer3/layer4 with stride removed and dilation 2/4
    y = layer_forward(y, params["layer1"], first_stride=1, dilation=1)
    y = layer_forward(y, params["layer2"], first_stride=2, dilation=1)
    y = layer_forward(y, params["layer3"], first_stride=1, dilation=2)
    y = layer_forward(y, params["layer4"], first_stride=1, dilation=4)

    # pyramid pooling module
    y = psp_forward(y, params["psp"])

    # fc head: ConvBnRelu(2*latent, 512, 3, pad=1) -> Dropout2d(eval=id) -> Conv2d(512, num_class, 1)
    y = conv_spatial_direct(y, params["fc1"], padding=1, dilation=1, relu=True)
    y = conv1x1(y, params["fc2"], relu=False)
    y = y[..., :NUM_CLASS].astype(jnp.float32)                     # drop padded class channels

    # F.interpolate(..., mode='bilinear') back to input resolution
    y = bilinear_resize(y, H_in, W_in)
    return jnp.transpose(y, (0, 3, 1, 2))                          # NHWC -> NCHW


# ----------------------------- main ---------------------------------------------------
if __name__ == "__main__":
    key = jax.random.PRNGKey(0)
    k_param, k_input = jax.random.split(key)
    params, latent = init_params(k_param)

    x = jax.random.normal(k_input, (2, 3, 64, 64), jnp.float32)    # NCHW like PyTorch
    fwd = jax.jit(pspnet_forward)                                  # fuse the plain-JAX glue
    out = fwd(x, params)
    out = jax.block_until_ready(out)

    assert out.shape == (2, NUM_CLASS, 64, 64), out.shape
    assert bool(jnp.all(jnp.isfinite(out)))
    print("KERNEL_OK")
</pallas_src>

<mosaic_0001>
module attributes {stable_mosaic.version = 11 : i64} {
  func.func @gemm_bias_kernel(%arg0: i32, %arg1: memref<1024x256xbf16, #tpu.memory_space<vmem>>, %arg2: memref<256x128xbf16, #tpu.memory_space<vmem>>, %arg3: memref<1x128xf32, #tpu.memory_space<vmem>>, %arg4: memref<1024x128xbf16, #tpu.memory_space<vmem>>) attributes {dimension_semantics = [#tpu.dimension_semantics<parallel>], iteration_bounds = array<i64: 2>, scalar_prefetch = 0 : i64, scratch_operands = 0 : i64, tpu.core_type = #tpu.core_type<tc>, window_params = [{transform_indices = @transform_0, window_bounds = array<i64: 1024, 256>}, {pipeline_mode = #tpu.pipeline_mode<synchronous>, transform_indices = @transform_1, window_bounds = array<i64: 256, 128>}, {pipeline_mode = #tpu.pipeline_mode<synchronous>, transform_indices = @transform_2, window_bounds = array<i64: 1, 128>}, {transform_indices = @transform_3, window_bounds = array<i64: 1024, 128>}]} {
    %c0 = arith.constant 0 : index
    %c0_0 = arith.constant 0 : index
    %0 = vector.load %arg1[%c0, %c0_0] : memref<1024x256xbf16, #tpu.memory_space<vmem>>, vector<1024x256xbf16>
    %c0_1 = arith.constant 0 : index
    %c0_2 = arith.constant 0 : index
    %1 = vector.load %arg2[%c0_1, %c0_2] : memref<256x128xbf16, #tpu.memory_space<vmem>>, vector<256x128xbf16>
    %cst = arith.constant dense<0.000000e+00> : vector<1024x128xf32>
    %2 = tpu.matmul %0, %1, %cst {dimension_numbers = #tpu.dot_dimension_numbers<[1], [0], [0], [1], [0, 0, 1, 1], [], []>} : vector<1024x256xbf16>, vector<256x128xbf16>, vector<1024x128xf32> -> vector<1024x128xf32>
    %c0_3 = arith.constant 0 : index
    %c0_4 = arith.constant 0 : index
    %3 = vector.load %arg3[%c0_3, %c0_4] : memref<1x128xf32, #tpu.memory_space<vmem>>, vector<1x128xf32>
    %4 = vector.broadcast %3 : vector<1x128xf32> to vector<1024x128xf32>
    %5 = arith.addf %2, %4 : vector<1024x128xf32>
    %cst_5 = arith.constant 0.000000e+00 : f32
    %6 = vector.broadcast %cst_5 : f32 to vector<1024x128xf32>
    %7 = arith.maximumf %5, %6 : vector<1024x128xf32>
    %8 = arith.truncf %7 : vector<1024x128xf32> to vector<1024x128xbf16>
    %c0_6 = arith.constant 0 : index
    %c0_7 = arith.constant 0 : index
    %9 = vector.load %arg4[%c0_6, %c0_7] : memref<1024x128xbf16, #tpu.memory_space<vmem>>, vector<1024x128xbf16>
    tpu.vector_store %arg4[%c0_6, %c0_7], %8 {strides = array<i32>} : memref<1024x128xbf16, #tpu.memory_space<vmem>>, vector<1024x128xbf16>,
    return
  }
  func.func @transform_0(%arg0: i32) -> (i32, i32) {
    %c0_i32 = arith.constant 0 : i32
    %c0_i32_0 = arith.constant 0 : i32
    return %arg0, %c0_i32 : i32, i32
  }
  func.func @transform_1(%arg0: i32) -> (i32, i32) {
    %c0_i32 = arith.constant 0 : i32
    %c0_i32_0 = arith.constant 0 : i32
    %c0_i32_1 = arith.constant 0 : i32
    return %c0_i32, %c0_i32_0 : i32, i32
  }
  func.func @transform_2(%arg0: i32) -> (i32, i32) {
    %c0_i32 = arith.constant 0 : i32
    %c0_i32_0 = arith.constant 0 : i32
    %c0_i32_1 = arith.constant 0 : i32
    return %c0_i32, %c0_i32_0 : i32, i32
  }
  func.func @transform_3(%arg0: i32) -> (i32, i32) {
    %c0_i32 = arith.constant 0 : i32
    %c0_i32_0 = arith.constant 0 : i32
    return %arg0, %c0_i32 : i32, i32
  }
}

</mosaic_0001>

<llo_original>
// kernel: gemm_bias_act.1
$region0: #{gemm_bias_act.1}
  #allocation0 [shape = 'u32[]', space=smem, size = 0x4, offset = 0x4, fixed_abs, tag = 'smem constant byte address 0x4 - core index']
  #allocation1 [shape = 'u32[144,128]{1,0:T(1,128)}', space=vmem, size = 0x12000, scoped, tag = 'internal scratch']
  %s0 = inlined_call_operand.hbm [shape: bf16[2048,256], index: 0, kind: input, shape index: {}]
  %s1 = inlined_call_operand.hbm [shape: bf16[256,128], index: 1, kind: input, shape index: {}]
  %s2 = inlined_call_operand.vmem [shape: f32[1,128], index: 2, kind: input, shape index: {}]
  %s3 = inlined_call_operand.hbm [shape: bf16[2048,128], index: 3, kind: output, shape index: {}]
  %s4 = sld [smem:[#allocation0]]
  $region53: #{gemm_bias_act.1} parent=0
    _
  %s6 = ssub.s32 1, %s4
  %s7 = scalar_select 0, %s6, %s4
  $region1: #{gemm_bias_act.1} parent=0
    #allocation2 [shape = 'u8[1048576]{0}', space=vmem, size = 0x100000, scoped, tag = 'input window, operand 0']
    #allocation3 [shape = 's32[2]{0}', space=sflag, size = 0x8, scoped, tag = 'scoped memory for gemm_bias_act.1']
    #allocation4 [shape = 's32[2]{0}', space=sflag, size = 0x8, scoped, tag = 'scoped memory for gemm_bias_act.1']
    #allocation5 [shape = 'u8[65536]{0}', space=vmem, size = 0x10000, scoped, tag = 'input window, operand 1, single buffered']
    #allocation6 [shape = 's32[1]{0}', space=sflag, size = 0x4, scoped, tag = 'scoped memory for gemm_bias_act.1']
    #allocation7 [shape = 'u8[524288]{0}', space=vmem, size = 0x80000, scoped, tag = 'output window, operand 0']
    %8 = vsyncpa [#allocation3], 0
    %s9 = scalar_lea.sflag [#allocation3], 1
    %10 = vsyncpa %s9, 0
    %11 = vsyncpa [#allocation6], 0
    %12 = vsyncpa [#allocation4], 0
    %s13 = scalar_lea.sflag [#allocation4], 1
    %14 = vsyncpa %s13, 0
    loop: start=0, step=1, limit=4
    $region2: #{gemm_bias_act.1} parent=1 // loop_pre_header
      _
    $region3: #{gemm_bias_act.1} parent=1 // loop_header
      %s16 = sphi 0, %s20
      %p17 = scmp.ge.s32.totalorder %s16, 4
      %s26 = sphi 0, %s28
      %s29 = sphi 0, %s26
      %s30 = sphi 0, %s29
      %s46 = sphi 0, %s30
      %s50 = sphi 0, %s50
      %s52 = sphi 0, %s50
      %s53 = sphi 0, %s52
      %s67 = sphi 0, %s53
      %s71 = sphi 0, %s71
      %s73 = sphi 0, %s71
      %s74 = sphi 0, %s73
      %s88 = sphi 0, %s74
      %s94 = sphi 0, %s96
      %s97 = sphi 0, %s94
      %s98 = sphi 0, %s97
      %s114 = sphi 0, %s98
    $region4: #{gemm_bias_act.1} parent=1 // loop_header_branch
      %19 = sbr.rel (%p17) target = $region8
    $region5: #{gemm_bias_act.1} parent=1 // loop_body
      %s21 = ssub.s32 %s16, 1
      %s22 = ssub.s32 %s16, 2
      %s23 = sadd.s32 %s16, 1
      %s24 = ssub.s32 %s16, %s23
      %p25 = scmp.eq.s32.totalorder %s24, 0
      %s27 = sadd.s32 %s26, 1
      %s28 = scalar_select %p25, %s26, %s27
      %p31 = pneg %p25
      %p32 = scmp.eq.s32.totalorder %s16, 1
      %p33 = por %p31, %p32
      %p34 = scmp.ne.s32.totalorder %s26, %s29
      %p35 = scmp.eq.s32.totalorder %s16, 0
      %p36 = por %p34, %p35
      %p37 = scmp.ne.s32.totalorder %s26, %s29
      %p38 = scmp.eq.s32.totalorder %s21, 1
      %p39 = por %p37, %p38
      %p40 = scmp.ne.s32.totalorder %s29, %s30
      %p41 = scmp.eq.s32.totalorder %s21, 0
      %p42 = por %p40, %p41
      %p43 = scmp.ne.s32.totalorder %s29, %s30
      %p44 = scmp.eq.s32.totalorder %s22, 1
      %p45 = por %p43, %p44
      %p47 = scmp.ne.s32.totalorder %s30, %s46
      %p48 = scmp.eq.s32.totalorder %s22, 0
      %p49 = por %p47, %p48
      %s51 = sadd.s32 %s50, 1
      %p54 = scmp.eq.s32.totalorder %s16, 1
      %p55 = scmp.ne.s32.totalorder %s50, %s52
      %p56 = scmp.eq.s32.totalorder %s16, 0
      %p57 = por %p55, %p56
      %p58 = scmp.ne.s32.totalorder %s50, %s52
      %p59 = scmp.eq.s32.totalorder %s21, 1
      %p60 = por %p58, %p59
      %p61 = scmp.ne.s32.totalorder %s52, %s53
      %p62 = scmp.eq.s32.totalorder %s21, 0
      %p63 = por %p61, %p62
      %p64 = scmp.ne.s32.totalorder %s52, %s53
      %p65 = scmp.eq.s32.totalorder %s22, 1
      %p66 = por %p64, %p65
      %p68 = scmp.ne.s32.totalorder %s53, %s67
      %p69 = scmp.eq.s32.totalorder %s22, 0
      %p70 = por %p68, %p69
      %s72 = sadd.s32 %s71, 1
      %p75 = scmp.eq.s32.totalorder %s16, 1
      %p76 = scmp.ne.s32.totalorder %s71, %s73
      %p77 = scmp.eq.s32.totalorder %s16, 0
      %p78 = por %p76, %p77
      %p79 = scmp.ne.s32.totalorder %s71, %s73
      %p80 = scmp.eq.s32.totalorder %s21, 1
      %p81 = por %p79, %p80
      %p82 = scmp.ne.s32.totalorder %s73, %s74
      %p83 = scmp.eq.s32.totalorder %s21, 0
      %p84 = por %p82, %p83
      %p85 = scmp.ne.s32.totalorder %s73, %s74
      %p86 = scmp.eq.s32.totalorder %s22, 1
      %p87 = por %p85, %p86
      %p89 = scmp.ne.s32.totalorder %s74, %s88
      %p90 = scmp.eq.s32.totalorder %s22, 0
      %p91 = por %p89, %p90
      %s92 = ssub.s32 %s16, %s23
      %p93 = scmp.eq.s32.totalorder %s92, 0
      %s95 = sadd.s32 %s94, 1
      %s96 = scalar_select %p93, %s94, %s95
      %p99 = pneg %p93
      %p100 = scmp.eq.s32.totalorder %s16, 1
      %p101 = por %p99, %p100
      %p102 = scmp.ne.s32.totalorder %s94, %s97
      %p103 = scmp.eq.s32.totalorder %s16, 0
      %p104 = por %p102, %p103
      %p105 = scmp.ne.s32.totalorder %s94, %s97
      %p106 = scmp.eq.s32.totalorder %s21, 1
      %p107 = por %p105, %p106
      %p108 = scmp.ne.s32.totalorder %s97, %s98
      %p109 = scmp.eq.s32.totalorder %s21, 0
      %p110 = por %p108, %p109
      %p111 = scmp.ne.s32.totalorder %s97, %s98
      %p112 = scmp.eq.s32.totalorder %s22, 1
      %p113 = por %p111, %p112
      %p115 = scmp.ne.s32.totalorder %s98, %s114
      %p116 = scmp.eq.s32.totalorder %s22, 0
      %p117 = por %p115, %p116
      %p118 = scmp.le.s32.totalorder 1, %s16
      %p119 = scmp.lt.s32.totalorder %s16, 3
      %p120 = pnand %p118, %p119
      %p121 = pneg %p120
      // Predicated region
      $region9: #{gemm_bias_act.1} parent=5 // pred_check
        _
      $region10: #{gemm_bias_act.1} parent=5 // pred_check_branch
        %123 = sbr.rel (%p120) target = $region12
      $region11: #{gemm_bias_act.1} parent=5 // pred_region
        %s124 = ssub.s32 %s16, 1
        // Predicated region
        $region13: #{gemm_bias_act.1} parent=11 // pred_check
          %p125 = pneg %p63
        $region14: #{gemm_bias_act.1} parent=11 // pred_check_branch
          %127 = sbr.rel (%p125) target = $region16
        $region15: #{gemm_bias_act.1} parent=11 // pred_region
          %s129 = ssub.s32 2048, 2048
          %130 = vsyncadd [#allocation6], %s129
          %s131 = sshll.u32 [#allocation5], 4
          %s132 = int_to_ptr.vmem [resolvable:$true] %s131
          %137 = dma.hbm_to_vmem [thread:$0]  %s1, 2048, %s132, [#allocation6], 64, 64, 4
        $region16: #{gemm_bias_act.1} parent=11 // pred_fallthru
          _
        // Predicated region
        $region17: #{gemm_bias_act.1} parent=11 // pred_check
          %p138 = pneg %p84
        $region18: #{gemm_bias_act.1} parent=11 // pred_check_branch
          %140 = sbr.rel (%p138) target = $region20
        $region19: #{gemm_bias_act.1} parent=11 // pred_region
          _
        $region20: #{gemm_bias_act.1} parent=11 // pred_fallthru
          _
      $region12: #{gemm_bias_act.1} parent=5 // pred_fallthru
        _
      %p141 = scmp.lt.s32.totalorder %s16, 2
      // Predicated region
      $region21: #{gemm_bias_act.1} parent=5 // pred_check
        %p142 = pneg %p141
      $region22: #{gemm_bias_act.1} parent=5 // pred_check_branch
        %144 = sbr.rel (%p142) target = $region24
      $region23: #{gemm_bias_act.1} parent=5 // pred_region
        // Predicated region
        $region25: #{gemm_bias_act.1} parent=23 // pred_check
          %p145 = pneg %p36
        $region26: #{gemm_bias_act.1} parent=23 // pred_check_branch
          %147 = sbr.rel (%p145) target = $region28
        $region27: #{gemm_bias_act.1} parent=23 // pred_region
          %s148 = sand.u32 %s26, 1
          %s149 = scalar_lea.sflag [#allocation3], %s148
          %s150 = sand.u32 %s26, 1
          %s151 = smul.addr %s150, 1024
          %s152 = scalar_lea.vmem [#allocation2], %s151
          %s153 = smul.u32 128, %s16
          %s155 = ssub.s32 16384, 16384
          %156 = vsyncadd %s149, %s155
          %s157 = smul.addr %s153, 2
          %s158 = smul.addr %s157, 64
          %s159 = scalar_lea.hbm %s0, %s158
          %s160 = sshll.u32 %s152, 4
          %s161 = int_to_ptr.vmem [resolvable:$true] %s160
          %166 = dma.hbm_to_vmem [thread:$0]  %s159, 16384, %s161, %s149, 128, 128, 8
        $region28: #{gemm_bias_act.1} parent=23 // pred_fallthru
          _
      $region24: #{gemm_bias_act.1} parent=5 // pred_fallthru
        _
      %p167 = scmp.le.s32.totalorder 1, %s16
      %p168 = scmp.lt.s32.totalorder %s16, 3
      %p169 = pnand %p167, %p168
      %p170 = pneg %p169
      // Predicated region
      $region29: #{gemm_bias_act.1} parent=5 // pred_check
        _
      $region30: #{gemm_bias_act.1} parent=5 // pred_check_branch
        %172 = sbr.rel (%p169) target = $region32
      $region31: #{gemm_bias_act.1} parent=5 // pred_region
        %s173 = ssub.s32 %s16, 1
        %s174 = sand.u32 %s29, 1
        %s175 = scalar_lea.sflag [#allocation3], %s174
        %s176 = sand.u32 %s29, 1
        %s177 = smul.addr %s176, 1024
        %s178 = scalar_lea.vmem [#allocation2], %s177
        // Predicated region
        $region33: #{gemm_bias_act.1} parent=31 // pred_check
          %p179 = pneg %p42
        $region34: #{gemm_bias_act.1} parent=31 // pred_check_branch
          %181 = sbr.rel (%p179) target = $region36
        $region35: #{gemm_bias_act.1} parent=31 // pred_region
          %182 = dma.done %s175, 16384
        $region36: #{gemm_bias_act.1} parent=31 // pred_fallthru
          _
        // Predicated region
        $region37: #{gemm_bias_act.1} parent=31 // pred_check
          %p183 = pneg %p63
        $region38: #{gemm_bias_act.1} parent=31 // pred_check_branch
          %185 = sbr.rel (%p183) target = $region40
        $region39: #{gemm_bias_act.1} parent=31 // pred_region
          %186 = dma.done [#allocation6], 2048
        $region40: #{gemm_bias_act.1} parent=31 // pred_fallthru
          _
        %s187 = sand.u32 %s29, 1
        %s188 = scalar_lea.sflag [#allocation3], %s187
        %s189 = sand.u32 %s29, 1
        %s190 = smul.addr %s189, 1024
        %s191 = scalar_lea.vmem [#allocation2], %s190
        %p192 = pneg %p42
        %p193 = pneg %p39
        %p194 = pneg %p63
        %p195 = pneg %p60
        %p196 = pneg %p84
        %p197 = pneg %p81
        %p198 = pneg %p110
        %p199 = pneg %p107
        %s200 = sand.u32 %s97, 1
        %s201 = scalar_lea.sflag [#allocation4], %s200
        %s202 = sand.u32 %s97, 1
        %s203 = smul.addr %s202, 512
        %s204 = scalar_lea.vmem [#allocation7], %s203
        %s205 = smul.u32 128, %s21
        %s206 = smul.u32 128, %s21
        %v208 = vld [vmem:[%s178] sm:$0xff]
        %v209 = vld [vmem:[%s178 + $0x8] sm:$0xff]
        %v210 = vld [vmem:[%s178 + $0x10] sm:$0xff]
        %v211 = vld [vmem:[%s178 + $0x18] sm:$0xff]
        %v212 = vld [vmem:[%s178 + $0x20] sm:$0xff]
        %v213 = vld [vmem:[%s178 + $0x28] sm:$0xff]
        %v214 = vld [vmem:[%s178 + $0x30] sm:$0xff]
        %v215 = vld [vmem:[%s178 + $0x38] sm:$0xff]
        %v216 = vld [vmem:[%s178 + $0x40] sm:$0xff]
        %v217 = vld [vmem:[%s178 + $0x48] sm:$0xff]
        %v218 = vld [vmem:[%s178 + $0x50] sm:$0xff]
        %v219 = vld [vmem:[%s178 + $0x58] sm:$0xff]
        %v220 = vld [vmem:[%s178 + $0x60] sm:$0xff]
        %v221 = vld [vmem:[%s178 + $0x68] sm:$0xff]
        %v222 = vld [vmem:[%s178 + $0x70] sm:$0xff]
        %v223 = vld [vmem:[%s178 + $0x78] sm:$0xff]
        %v224 = vld [vmem:[%s178 + $0x80] sm:$0xff]
        %v225 = vld [vmem:[%s178 + $0x88] sm:$0xff]
        %v226 = vld [vmem:[%s178 + $0x90] sm:$0xff]
        %v227 = vld [vmem:[%s178 + $0x98] sm:$0xff]
        %v228 = vld [vmem:[%s178 + $0xa0] sm:$0xff]
        %v229 = vld [vmem:[%s178 + $0xa8] sm:$0xff]
        %v230 = vld [vmem:[%s178 + $0xb0] sm:$0xff]
        %v231 = vld [vmem:[%s178 + $0xb8] sm:$0xff]
        %v232 = vld [vmem:[%s178 + $0xc0] sm:$0xff]
        %v233 = vld [vmem:[%s178 + $0xc8] sm:$0xff]
        %v234 = vld [vmem:[%s178 + $0xd0] sm:$0xff]
        %v235 = vld [vmem:[%s178 + $0xd8] sm:$0xff]
        %v236 = vld [vmem:[%s178 + $0xe0] sm:$0xff]
        %v237 = vld [vmem:[%s178 + $0xe8] sm:$0xff]
        %v238 = vld [vmem:[%s178 + $0xf0] sm:$0xff]
        %v239 = vld [vmem:[%s178 + $0xf8] sm:$0xff]
        %v240 = vld [vmem:[%s178 + $0x100] sm:$0xff]
        %v241 = vld [vmem:[%s178 + $0x108] sm:$0xff]
        %v242 = vld [vmem:[%s178 + $0x110] sm:$0xff]
        %v243 = vld [vmem:[%s178 + $0x118] sm:$0xff]
        %v244 = vld [vmem:[%s178 + $0x120] sm:$0xff]
        %v245 = vld [vmem:[%s178 + $0x128] sm:$0xff]
        %v246 = vld [vmem:[%s178 + $0x130] sm:$0xff]
        %v247 = vld [vmem:[%s178 + $0x138] sm:$0xff]
        %v248 = vld [vmem:[%s178 + $0x140] sm:$0xff]
        %v249 = vld [vmem:[%s178 + $0x148] sm:$0xff]
        %v250 = vld [vmem:[%s178 + $0x150] sm:$0xff]
        %v251 = vld [vmem:[%s178 + $0x158] sm:$0xff]
        %v252 = vld [vmem:[%s178 + $0x160] sm:$0xff]
        %v253 = vld [vmem:[%s178 + $0x168] sm:$0xff]
        %v254 = vld [vmem:[%s178 + $0x170] sm:$0xff]
        %v255 = vld [vmem:[%s178 + $0x178] sm:$0xff]
        %v256 = vld [vmem:[%s178 + $0x180] sm:$0xff]
        %v257 = vld [vmem:[%s178 + $0x188] sm:$0xff]
        %v258 = vld [vmem:[%s178 + $0x190] sm:$0xff]
        %v259 = vld [vmem:[%s178 + $0x198] sm:$0xff]
        %v260 = vld [vmem:[%s178 + $0x1a0] sm:$0xff]
        %v261 = vld [vmem:[%s178 + $0x1a8] sm:$0xff]
        %v262 = vld [vmem:[%s178 + $0x1b0] sm:$0xff]
        %v263 = vld [vmem:[%s178 + $0x1b8] sm:$0xff]
        %v264 = vld [vmem:[%s178 + $0x1c0] sm:$0xff]
        %v265 = vld [vmem:[%s178 + $0x1c8] sm:$0xff]
        %v266 = vld [vmem:[%s178 + $0x1d0] sm:$0xff]
        %v267 = vld [vmem:[%s178 + $0x1d8] sm:$0xff]
        %v268 = vld [vmem:[%s178 + $0x1e0] sm:$0xff]
        %v269 = vld [vmem:[%s178 + $0x1e8] sm:$0xff]
        %v270 = vld [vmem:[%s178 + $0x1f0] sm:$0xff]
        %v271 = vld [vmem:[%s178 + $0x1f8] sm:$0xff]
        %v272 = vld [vmem:[%s178 + $0x200] sm:$0xff]
        %v273 = vld [vmem:[%s178 + $0x208] sm:$0xff]
        %v274 = vld [vmem:[%s178 + $0x210] sm:$0xff]
        %v275 = vld [vmem:[%s178 + $0x218] sm:$0xff]
        %v276 = vld [vmem:[%s178 + $0x220] sm:$0xff]
        %v277 = vld [vmem:[%s178 + $0x228] sm:$0xff]
        %v278 = vld [vmem:[%s178 + $0x230] sm:$0xff]
        %v279 = vld [vmem:[%s178 + $0x238] sm:$0xff]
        %v280 = vld [vmem:[%s178 + $0x240] sm:$0xff]
        %v281 = vld [vmem:[%s178 + $0x248] sm:$0xff]
        %v282 = vld [vmem:[%s178 + $0x250] sm:$0xff]
        %v283 = vld [vmem:[%s178 + $0x258] sm:$0xff]
        %v284 = vld [vmem:[%s178 + $0x260] sm:$0xff]
        %v285 = vld [vmem:[%s178 + $0x268] sm:$0xff]
        %v286 = vld [vmem:[%s178 + $0x270] sm:$0xff]
        %v287 = vld [vmem:[%s178 + $0x278] sm:$0xff]
        %v288 = vld [vmem:[%s178 + $0x280] sm:$0xff]
        %v289 = vld [vmem:[%s178 + $0x288] sm:$0xff]
        %v290 = vld [vmem:[%s178 + $0x290] sm:$0xff]
        %v291 = vld [vmem:[%s178 + $0x298] sm:$0xff]
        %v292 = vld [vmem:[%s178 + $0x2a0] sm:$0xff]
        %v293 = vld [vmem:[%s178 + $0x2a8] sm:$0xff]
        %v294 = vld [vmem:[%s178 + $0x2b0] sm:$0xff]
        %v295 = vld [vmem:[%s178 + $0x2b8] sm:$0xff]
        %v296 = vld [vmem:[%s178 + $0x2c0] sm:$0xff]
        %v297 = vld [vmem:[%s178 + $0x2c8] sm:$0xff]
        %v298 = vld [vmem:[%s178 + $0x2d0] sm:$0xff]
        %v299 = vld [vmem:[%s178 + $0x2d8] sm:$0xff]
        %v300 = vld [vmem:[%s178 + $0x2e0] sm:$0xff]
        %v301 = vld [vmem:[%s178 + $0x2e8] sm:$0xff]
        %v302 = vld [vmem:[%s178 + $0x2f0] sm:$0xff]
        %v303 = vld [vmem:[%s178 + $0x2f8] sm:$0xff]
        %v304 = vld [vmem:[%s178 + $0x300] sm:$0xff]
        %v305 = vld [vmem:[%s178 + $0x308] sm:$0xff]
        %v306 = vld [vmem:[%s178 + $0x310] sm:$0xff]
        %v307 = vld [vmem:[%s178 + $0x318] sm:$0xff]
        %v308 = vld [vmem:[%s178 + $0x320] sm:$0xff]
        %v309 = vld [vmem:[%s178 + $0x328] sm:$0xff]
        %v310 = vld [vmem:[%s178 + $0x330] sm:$0xff]
        %v311 = vld [vmem:[%s178 + $0x338] sm:$0xff]
        %v312 = vld [vmem:[%s178 + $0x340] sm:$0xff]
        %v313 = vld [vmem:[%s178 + $0x348] sm:$0xff]
        %v314 = vld [vmem:[%s178 + $0x350] sm:$0xff]
        %v315 = vld [vmem:[%s178 + $0x358] sm:$0xff]
        %v316 = vld [vmem:[%s178 + $0x360] sm:$0xff]
        %v317 = vld [vmem:[%s178 + $0x368] sm:$0xff]
        %v318 = vld [vmem:[%s178 + $0x370] sm:$0xff]
        %v319 = vld [vmem:[%s178 + $0x378] sm:$0xff]
        %v320 = vld [vmem:[%s178 + $0x380] sm:$0xff]
        %v321 = vld [vmem:[%s178 + $0x388] sm:$0xff]
        %v322 = vld [vmem:[%s178 + $0x390] sm:$0xff]
        %v323 = vld [vmem:[%s178 + $0x398] sm:$0xff]
        %v324 = vld [vmem:[%s178 + $0x3a0] sm:$0xff]
        %v325 = vld [vmem:[%s178 + $0x3a8] sm:$0xff]
        %v326 = vld [vmem:[%s178 + $0x3b0] sm:$0xff]
        %v327 = vld [vmem:[%s178 + $0x3b8] sm:$0xff]
        %v328 = vld [vmem:[%s178 + $0x3c0] sm:$0xff]
        %v329 = vld [vmem:[%s178 + $0x3c8] sm:$0xff]
        %v330 = vld [vmem:[%s178 + $0x3d0] sm:$0xff]
        %v331 = vld [vmem:[%s178 + $0x3d8] sm:$0xff]
        %v332 = vld [vmem:[%s178 + $0x3e0] sm:$0xff]
        %v333 = vld [vmem:[%s178 + $0x3e8] sm:$0xff]
        %v334 = vld [vmem:[%s178 + $0x3f0] sm:$0xff]
        %v335 = vld [vmem:[%s178 + $0x3f8] sm:$0xff]
        %v336 = vld [vmem:[#allocation5] sm:$0xf]
        %v337 = vld [vmem:[#allocation5 + $0x4] sm:$0xf]
        %v338 = vld [vmem:[#allocation5 + $0x8] sm:$0xf]
        %v339 = vld [vmem:[#allocation5 + $0xc] sm:$0xf]
        %v340 = vld [vmem:[#allocation5 + $0x10] sm:$0xf]
        %v341 = vld [vmem:[#allocation5 + $0x14] sm:$0xf]
        %v342 = vld [vmem:[#allocation5 + $0x18] sm:$0xf]
        %v343 = vld [vmem:[#allocation5 + $0x1c] sm:$0xf]
        %v344 = vld [vmem:[#allocation5 + $0x20] sm:$0xf]
        %v345 = vld [vmem:[#allocation5 + $0x24] sm:$0xf]
        %v346 = vld [vmem:[#allocation5 + $0x28] sm:$0xf]
        %v347 = vld [vmem:[#allocation5 + $0x2c] sm:$0xf]
        %v348 = vld [vmem:[#allocation5 + $0x30] sm:$0xf]
        %v349 = vld [vmem:[#allocation5 + $0x34] sm:$0xf]
        %v350 = vld [vmem:[#allocation5 + $0x38] sm:$0xf]
        %v351 = vld [vmem:[#allocation5 + $0x3c] sm:$0xf]
        %v352 = vld [vmem:[#allocation5 + $0x40] sm:$0xf]
        %v353 = vld [vmem:[#allocation5 + $0x44] sm:$0xf]
        %v354 = vld [vmem:[#allocation5 + $0x48] sm:$0xf]
        %v355 = vld [vmem:[#allocation5 + $0x4c] sm:$0xf]
        %v356 = vld [vmem:[#allocation5 + $0x50] sm:$0xf]
        %v357 = vld [vmem:[#allocation5 + $0x54] sm:$0xf]
        %v358 = vld [vmem:[#allocation5 + $0x58] sm:$0xf]
        %v359 = vld [vmem:[#allocation5 + $0x5c] sm:$0xf]
        %v360 = vld [vmem:[#allocation5 + $0x60] sm:$0xf]
        %v361 = vld [vmem:[#allocation5 + $0x64] sm:$0xf]
        %v362 = vld [vmem:[#allocation5 + $0x68] sm:$0xf]
        %v363 = vld [vmem:[#allocation5 + $0x6c] sm:$0xf]
        %v364 = vld [vmem:[#allocation5 + $0x70] sm:$0xf]
        %v365 = vld [vmem:[#allocation5 + $0x74] sm:$0xf]
        %v366 = vld [vmem:[#allocation5 + $0x78] sm:$0xf]
        %v367 = vld [vmem:[#allocation5 + $0x7c] sm:$0xf]
        %v368 = vld [vmem:[%s2] sm:$0x1]
        %v370 = vlaneseq
        %v371 = vshrl.u32 %v370, 7
        %v372 = vsub.s32 0, %v371
        %v373 = vrot.slane %v368, %v372
        %v503 = vunpack.c.l.b16 %v208
        %v504 = vunpack.c.h.b16 %v208
        %v505 = vunpack.c.l.b16 %v209
        %v506 = vunpack.c.h.b16 %v209
        %v507 = vunpack.c.l.b16 %v210
        %v508 = vunpack.c.h.b16 %v210
        %v509 = vunpack.c.l.b16 %v211
        %v510 = vunpack.c.h.b16 %v211
        %v511 = vunpack.c.l.b16 %v212
        %v512 = vunpack.c.h.b16 %v212
        %v513 = vunpack.c.l.b16 %v213
        %v514 = vunpack.c.h.b16 %v213
        %v515 = vunpack.c.l.b16 %v214
        %v516 = vunpack.c.h.b16 %v214
        %v517 = vunpack.c.l.b16 %v215
        %v518 = vunpack.c.h.b16 %v215
        %v519 = vunpack.c.l.b16 %v216
        %v520 = vunpack.c.h.b16 %v216
        %v521 = vunpack.c.l.b16 %v217
        %v522 = vunpack.c.h.b16 %v217
        %v523 = vunpack.c.l.b16 %v218
        %v524 = vunpack.c.h.b16 %v218
        %v525 = vunpack.c.l.b16 %v219
        %v526 = vunpack.c.h.b16 %v219
        %v527 = vunpack.c.l.b16 %v220
        %v528 = vunpack.c.h.b16 %v220
        %v529 = vunpack.c.l.b16 %v221
        %v530 = vunpack.c.h.b16 %v221
        %v531 = vunpack.c.l.b16 %v222
        %v532 = vunpack.c.h.b16 %v222
        %v533 = vunpack.c.l.b16 %v223
        %v534 = vunpack.c.h.b16 %v223
        %v535 = vunpack.c.l.b16 %v224
        %v536 = vunpack.c.h.b16 %v224
        %v537 = vunpack.c.l.b16 %v225
        %v538 = vunpack.c.h.b16 %v225
        %v539 = vunpack.c.l.b16 %v226
        %v540 = vunpack.c.h.b16 %v226
        %v541 = vunpack.c.l.b16 %v227
        %v542 = vunpack.c.h.b16 %v227
        %v543 = vunpack.c.l.b16 %v228
        %v544 = vunpack.c.h.b16 %v228
        %v545 = vunpack.c.l.b16 %v229
        %v546 = vunpack.c.h.b16 %v229
        %v547 = vunpack.c.l.b16 %v230
        %v548 = vunpack.c.h.b16 %v230
        %v549 = vunpack.c.l.b16 %v231
        %v550 = vunpack.c.h.b16 %v231
        %v551 = vunpack.c.l.b16 %v232
        %v552 = vunpack.c.h.b16 %v232
        %v553 = vunpack.c.l.b16 %v233
        %v554 = vunpack.c.h.b16 %v233
        %v555 = vunpack.c.l.b16 %v234
        %v556 = vunpack.c.h.b16 %v234
        %v557 = vunpack.c.l.b16 %v235
        %v558 = vunpack.c.h.b16 %v235
        %v559 = vunpack.c.l.b16 %v236
        %v560 = vunpack.c.h.b16 %v236
        %v561 = vunpack.c.l.b16 %v237
        %v562 = vunpack.c.h.b16 %v237
        %v563 = vunpack.c.l.b16 %v238
        %v564 = vunpack.c.h.b16 %v238
        %v565 = vunpack.c.l.b16 %v239
        %v566 = vunpack.c.h.b16 %v239
        %v567 = vunpack.c.l.b16 %v240
        %v568 = vunpack.c.h.b16 %v240
        %v569 = vunpack.c.l.b16 %v241
        %v570 = vunpack.c.h.b16 %v241
        %v571 = vunpack.c.l.b16 %v242
        %v572 = vunpack.c.h.b16 %v242
        %v573 = vunpack.c.l.b16 %v243
        %v574 = vunpack.c.h.b16 %v243
        %v575 = vunpack.c.l.b16 %v244
        %v576 = vunpack.c.h.b16 %v244
        %v577 = vunpack.c.l.b16 %v245
        %v578 = vunpack.c.h.b16 %v245
        %v579 = vunpack.c.l.b16 %v246
        %v580 = vunpack.c.h.b16 %v246
        %v581 = vunpack.c.l.b16 %v247
        %v582 = vunpack.c.h.b16 %v247
        %v583 = vunpack.c.l.b16 %v248
        %v584 = vunpack.c.h.b16 %v248
        %v585 = vunpack.c.l.b16 %v249
        %v586 = vunpack.c.h.b16 %v249
        %v587 = vunpack.c.l.b16 %v250
        %v588 = vunpack.c.h.b16 %v250
        %v589 = vunpack.c.l.b16 %v251
        %v590 = vunpack.c.h.b16 %v251
        %v591 = vunpack.c.l.b16 %v252
        %v592 = vunpack.c.h.b16 %v252
        %v593 = vunpack.c.l.b16 %v253
        %v594 = vunpack.c.h.b16 %v253
        %v595 = vunpack.c.l.b16 %v254
        %v596 = vunpack.c.h.b16 %v254
        %v597 = vunpack.c.l.b16 %v255
        %v598 = vunpack.c.h.b16 %v255
        %v599 = vunpack.c.l.b16 %v256
        %v600 = vunpack.c.h.b16 %v256
        %v601 = vunpack.c.l.b16 %v257
        %v602 = vunpack.c.h.b16 %v257
        %v603 = vunpack.c.l.b16 %v258
        %v604 = vunpack.c.h.b16 %v258
        %v605 = vunpack.c.l.b16 %v259
        %v606 = vunpack.c.h.b16 %v259
        %v607 = vunpack.c.l.b16 %v260
        %v608 = vunpack.c.h.b16 %v260
        %v609 = vunpack.c.l.b16 %v261
        %v610 = vunpack.c.h.b16 %v261
        %v611 = vunpack.c.l.b16 %v262
        %v612 = vunpack.c.h.b16 %v262
        %v613 = vunpack.c.l.b16 %v263
        %v614 = vunpack.c.h.b16 %v263
        %v615 = vunpack.c.l.b16 %v264
        %v616 = vunpack.c.h.b16 %v264
        %v617 = vunpack.c.l.b16 %v265
        %v618 = vunpack.c.h.b16 %v265
        %v619 = vunpack.c.l.b16 %v266
        %v620 = vunpack.c.h.b16 %v266
        %v621 = vunpack.c.l.b16 %v267
        %v622 = vunpack.c.h.b16 %v267
        %v623 = vunpack.c.l.b16 %v268
        %v624 = vunpack.c.h.b16 %v268
        %v625 = vunpack.c.l.b16 %v269
        %v626 = vunpack.c.h.b16 %v269
        %v627 = vunpack.c.l.b16 %v270
        %v628 = vunpack.c.h.b16 %v270
        %v629 = vunpack.c.l.b16 %v271
        %v630 = vunpack.c.h.b16 %v271
        %v631 = vunpack.c.l.b16 %v272
        %v632 = vunpack.c.h.b16 %v272
        %v633 = vunpack.c.l.b16 %v273
        %v634 = vunpack.c.h.b16 %v273
        %v635 = vunpack.c.l.b16 %v274
        %v636 = vunpack.c.h.b16 %v274
        %v637 = vunpack.c.l.b16 %v275
        %v638 = vunpack.c.h.b16 %v275
        %v639 = vunpack.c.l.b16 %v276
        %v640 = vunpack.c.h.b16 %v276
        %v641 = vunpack.c.l.b16 %v277
        %v642 = vunpack.c.h.b16 %v277
        %v643 = vunpack.c.l.b16 %v278
        %v644 = vunpack.c.h.b16 %v278
        %v645 = vunpack.c.l.b16 %v279
        %v646 = vunpack.c.h.b16 %v279
        %v647 = vunpack.c.l.b16 %v280
        %v648 = vunpack.c.h.b16 %v280
        %v649 = vunpack.c.l.b16 %v281
        %v650 = vunpack.c.h.b16 %v281
        %v651 = vunpack.c.l.b16 %v282
        %v652 = vunpack.c.h.b16 %v282
        %v653 = vunpack.c.l.b16 %v283
        %v654 = vunpack.c.h.b16 %v283
        %v655 = vunpack.c.l.b16 %v284
        %v656 = vunpack.c.h.b16 %v284
        %v657 = vunpack.c.l.b16 %v285
        %v658 = vunpack.c.h.b16 %v285
        %v659 = vunpack.c.l.b16 %v286
        %v660 = vunpack.c.h.b16 %v286
        %v661 = vunpack.c.l.b16 %v287
        %v662 = vunpack.c.h.b16 %v287
        %v663 = vunpack.c.l.b16 %v288
        %v664 = vunpack.c.h.b16 %v288
        %v665 = vunpack.c.l.b16 %v289
        %v666 = vunpack.c.h.b16 %v289
        %v667 = vunpack.c.l.b16 %v290
        %v668 = vunpack.c.h.b16 %v290
        %v669 = vunpack.c.l.b16 %v291
        %v670 = vunpack.c.h.b16 %v291
        %v671 = vunpack.c.l.b16 %v292
        %v672 = vunpack.c.h.b16 %v292
        %v673 = vunpack.c.l.b16 %v293
        %v674 = vunpack.c.h.b16 %v293
        %v675 = vunpack.c.l.b16 %v294
        %v676 = vunpack.c.h.b16 %v294
        %v677 = vunpack.c.l.b16 %v295
        %v678 = vunpack.c.h.b16 %v295
        %v679 = vunpack.c.l.b16 %v296
        %v680 = vunpack.c.h.b16 %v296
        %v681 = vunpack.c.l.b16 %v297
        %v682 = vunpack.c.h.b16 %v297
        %v683 = vunpack.c.l.b16 %v298
        %v684 = vunpack.c.h.b16 %v298
        %v685 = vunpack.c.l.b16 %v299
        %v686 = vunpack.c.h.b16 %v299
        %v687 = vunpack.c.l.b16 %v300
        %v688 = vunpack.c.h.b16 %v300
        %v689 = vunpack.c.l.b16 %v301
        %v690 = vunpack.c.h.b16 %v301
        %v691 = vunpack.c.l.b16 %v302
        %v692 = vunpack.c.h.b16 %v302
        %v693 = vunpack.c.l.b16 %v303
        %v694 = vunpack.c.h.b16 %v303
        %v695 = vunpack.c.l.b16 %v304
        %v696 = vunpack.c.h.b16 %v304
        %v697 = vunpack.c.l.b16 %v305
        %v698 = vunpack.c.h.b16 %v305
        %v699 = vunpack.c.l.b16 %v306
        %v700 = vunpack.c.h.b16 %v306
        %v701 = vunpack.c.l.b16 %v307
        %v702 = vunpack.c.h.b16 %v307
        %v703 = vunpack.c.l.b16 %v308
        %v704 = vunpack.c.h.b16 %v308
        %v705 = vunpack.c.l.b16 %v309
        %v706 = vunpack.c.h.b16 %v309
        %v707 = vunpack.c.l.b16 %v310
        %v708 = vunpack.c.h.b16 %v310
        %v709 = vunpack.c.l.b16 %v311
        %v710 = vunpack.c.h.b16 %v311
        %v711 = vunpack.c.l.b16 %v312
        %v712 = vunpack.c.h.b16 %v312
        %v713 = vunpack.c.l.b16 %v313
        %v714 = vunpack.c.h.b16 %v313
        %v715 = vunpack.c.l.b16 %v314
        %v716 = vunpack.c.h.b16 %v314
        %v717 = vunpack.c.l.b16 %v315
        %v718 = vunpack.c.h.b16 %v315
        %v719 = vunpack.c.l.b16 %v316
        %v720 = vunpack.c.h.b16 %v316
        %v721 = vunpack.c.l.b16 %v317
        %v722 = vunpack.c.h.b16 %v317
        %v723 = vunpack.c.l.b16 %v318
        %v724 = vunpack.c.h.b16 %v318
        %v725 = vunpack.c.l.b16 %v319
        %v726 = vunpack.c.h.b16 %v319
        %v727 = vunpack.c.l.b16 %v320
        %v728 = vunpack.c.h.b16 %v320
        %v729 = vunpack.c.l.b16 %v321
        %v730 = vunpack.c.h.b16 %v321
        %v731 = vunpack.c.l.b16 %v322
        %v732 = vunpack.c.h.b16 %v322
        %v733 = vunpack.c.l.b16 %v323
        %v734 = vunpack.c.h.b16 %v323
        %v735 = vunpack.c.l.b16 %v324
        %v736 = vunpack.c.h.b16 %v324
        %v737 = vunpack.c.l.b16 %v325
        %v738 = vunpack.c.h.b16 %v325
        %v739 = vunpack.c.l.b16 %v326
        %v740 = vunpack.c.h.b16 %v326
        %v741 = vunpack.c.l.b16 %v327
        %v742 = vunpack.c.h.b16 %v327
        %v743 = vunpack.c.l.b16 %v328
        %v744 = vunpack.c.h.b16 %v328
        %v745 = vunpack.c.l.b16 %v329
        %v746 = vunpack.c.h.b16 %v329
        %v747 = vunpack.c.l.b16 %v330
        %v748 = vunpack.c.h.b16 %v330
        %v749 = vunpack.c.l.b16 %v331
        %v750 = vunpack.c.h.b16 %v331
        %v751 = vunpack.c.l.b16 %v332
        %v752 = vunpack.c.h.b16 %v332
        %v753 = vunpack.c.l.b16 %v333
        %v754 = vunpack.c.h.b16 %v333
        %v755 = vunpack.c.l.b16 %v334
        %v756 = vunpack.c.h.b16 %v334
        %v757 = vunpack.c.l.b16 %v335
        %v758 = vunpack.c.h.b16 %v335
        %v759 = vpack.c.b16 %v505, %v503
        %v760 = vpack.c.b16 %v506, %v504
        %v761 = vpack.c.b16 %v509, %v507
        %v762 = vpack.c.b16 %v510, %v508
        %v763 = vpack.c.b16 %v513, %v511
        %v764 = vpack.c.b16 %v514, %v512
        %v765 = vpack.c.b16 %v517, %v515
        %v766 = vpack.c.b16 %v518, %v516
        %v767 = vpack.c.b16 %v521, %v519
        %v768 = vpack.c.b16 %v522, %v520
        %v769 = vpack.c.b16 %v525, %v523
        %v770 = vpack.c.b16 %v526, %v524
        %v771 = vpack.c.b16 %v529, %v527
        %v772 = vpack.c.b16 %v530, %v528
        %v773 = vpack.c.b16 %v533, %v531
        %v774 = vpack.c.b16 %v534, %v532
        %v775 = vpack.c.b16 %v537, %v535
        %v776 = vpack.c.b16 %v538, %v536
        %v777 = vpack.c.b16 %v541, %v539
        %v778 = vpack.c.b16 %v542, %v540
        %v779 = vpack.c.b16 %v545, %v543
        %v780 = vpack.c.b16 %v546, %v544
        %v781 = vpack.c.b16 %v549, %v547
        %v782 = vpack.c.b16 %v550, %v548
        %v783 = vpack.c.b16 %v553, %v551
        %v784 = vpack.c.b16 %v554, %v552
        %v785 = vpack.c.b16 %v557, %v555
        %v786 = vpack.c.b16 %v558, %v556
        %v787 = vpack.c.b16 %v561, %v559
        %v788 = vpack.c.b16 %v562, %v560
        %v789 = vpack.c.b16 %v565, %v563
        %v790 = vpack.c.b16 %v566, %v564
        %v791 = vpack.c.b16 %v569, %v567
        %v792 = vpack.c.b16 %v570, %v568
        %v793 = vpack.c.b16 %v573, %v571
        %v794 = vpack.c.b16 %v574, %v572
        %v795 = vpack.c.b16 %v577, %v575
        %v796 = vpack.c.b16 %v578, %v576
        %v797 = vpack.c.b16 %v581, %v579
        %v798 = vpack.c.b16 %v582, %v580
        %v799 = vpack.c.b16 %v585, %v583
        %v800 = vpack.c.b16 %v586, %v584
        %v801 = vpack.c.b16 %v589, %v587
        %v802 = vpack.c.b16 %v590, %v588
        %v803 = vpack.c.b16 %v593, %v591
        %v804 = vpack.c.b16 %v594, %v592
        %v805 = vpack.c.b16 %v597, %v595
        %v806 = vpack.c.b16 %v598, %v596
        %v807 = vpack.c.b16 %v601, %v599
        %v808 = vpack.c.b16 %v602, %v600
        %v809 = vpack.c.b16 %v605, %v603
        %v810 = vpack.c.b16 %v606, %v604
        %v811 = vpack.c.b16 %v609, %v607
        %v812 = vpack.c.b16 %v610, %v608
        %v813 = vpack.c.b16 %v613, %v611
        %v814 = vpack.c.b16 %v614, %v612
        %v815 = vpack.c.b16 %v617, %v615
        %v816 = vpack.c.b16 %v618, %v616
        %v817 = vpack.c.b16 %v621, %v619
        %v818 = vpack.c.b16 %v622, %v620
        %v819 = vpack.c.b16 %v625, %v623
        %v820 = vpack.c.b16 %v626, %v624
        %v821 = vpack.c.b16 %v629, %v627
        %v822 = vpack.c.b16 %v630, %v628
        %v823 = vpack.c.b16 %v633, %v631
        %v824 = vpack.c.b16 %v634, %v632
        %v825 = vpack.c.b16 %v637, %v635
        %v826 = vpack.c.b16 %v638, %v636
        %v827 = vpack.c.b16 %v641, %v639
        %v828 = vpack.c.b16 %v642, %v640
        %v829 = vpack.c.b16 %v645, %v643
        %v830 = vpack.c.b16 %v646, %v644
        %v831 = vpack.c.b16 %v649, %v647
        %v832 = vpack.c.b16 %v650, %v648
        %v833 = vpack.c.b16 %v653, %v651
        %v834 = vpack.c.b16 %v654, %v652
        %v835 = vpack.c.b16 %v657, %v655
        %v836 = vpack.c.b16 %v658, %v656
        %v837 = vpack.c.b16 %v661, %v659
        %v838 = vpack.c.b16 %v662, %v660
        %v839 = vpack.c.b16 %v665, %v663
        %v840 = vpack.c.b16 %v666, %v664
        %v841 = vpack.c.b16 %v669, %v667
        %v842 = vpack.c.b16 %v670, %v668
        %v843 = vpack.c.b16 %v673, %v671
        %v844 = vpack.c.b16 %v674, %v672
        %v845 = vpack.c.b16 %v677, %v675
        %v846 = vpack.c.b16 %v678, %v676
        %v847 = vpack.c.b16 %v681, %v679
        %v848 = vpack.c.b16 %v682, %v680
        %v849 = vpack.c.b16 %v685, %v683
        %v850 = vpack.c.b16 %v686, %v684
        %v851 = vpack.c.b16 %v689, %v687
        %v852 = vpack.c.b16 %v690, %v688
        %v853 = vpack.c.b16 %v693, %v691
        %v854 = vpack.c.b16 %v694, %v692
        %v855 = vpack.c.b16 %v697, %v695
        %v856 = vpack.c.b16 %v698, %v696
        %v857 = vpack.c.b16 %v701, %v699
        %v858 = vpack.c.b16 %v702, %v700
        %v859 = vpack.c.b16 %v705, %v703
        %v860 = vpack.c.b16 %v706, %v704
        %v861 = vpack.c.b16 %v709, %v707
        %v862 = vpack.c.b16 %v710, %v708
        %v863 = vpack.c.b16 %v713, %v711
        %v864 = vpack.c.b16 %v714, %v712
        %v865 = vpack.c.b16 %v717, %v715
        %v866 = vpack.c.b16 %v718, %v716
        %v867 = vpack.c.b16 %v721, %v719
        %v868 = vpack.c.b16 %v722, %v720
        %v869 = vpack.c.b16 %v725, %v723
        %v870 = vpack.c.b16 %v726, %v724
        %v871 = vpack.c.b16 %v729, %v727
        %v872 = vpack.c.b16 %v730, %v728
        %v873 = vpack.c.b16 %v733, %v731
        %v874 = vpack.c.b16 %v734, %v732
        %v875 = vpack.c.b16 %v737, %v735
        %v876 = vpack.c.b16 %v738, %v736
        %v877 = vpack.c.b16 %v741, %v739
        %v878 = vpack.c.b16 %v742, %v740
        %v879 = vpack.c.b16 %v745, %v743
        %v880 = vpack.c.b16 %v746, %v744
        %v881 = vpack.c.b16 %v749, %v747
        %v882 = vpack.c.b16 %v750, %v748
        %v883 = vpack.c.b16 %v753, %v751
        %v884 = vpack.c.b16 %v754, %v752
        %v885 = vpack.c.b16 %v757, %v755
        %v886 = vpack.c.b16 %v758, %v756
        %v1047 = vunpack.c.l.b16 %v336
        %v1048 = vunpack.c.l.b16 %v337
        %v1049 = vunpack.c.l.b16 %v338
        %v1050 = vunpack.c.l.b16 %v339
        %v1051 = vunpack.c.l.b16 %v340
        %v1052 = vunpack.c.l.b16 %v341
        %v1053 = vunpack.c.l.b16 %v342
        %v1054 = vunpack.c.l.b16 %v343
        %v1055 = vunpack.c.l.b16 %v344
        %v1056 = vunpack.c.l.b16 %v345
        %v1057 = vunpack.c.l.b16 %v346
        %v1058 = vunpack.c.l.b16 %v347
        %v1059 = vunpack.c.l.b16 %v348
        %v1060 = vunpack.c.l.b16 %v349
        %v1061 = vunpack.c.l.b16 %v350
        %v1062 = vunpack.c.l.b16 %v351
        %v1063 = vunpack.c.l.b16 %v352
        %v1064 = vunpack.c.l.b16 %v353
        %v1065 = vunpack.c.l.b16 %v354
        %v1066 = vunpack.c.l.b16 %v355
        %v1067 = vunpack.c.l.b16 %v356
        %v1068 = vunpack.c.l.b16 %v357
        %v1069 = vunpack.c.l.b16 %v358
        %v1070 = vunpack.c.l.b16 %v359
        %v1071 = vunpack.c.l.b16 %v360
        %v1072 = vunpack.c.l.b16 %v361
        %v1073 = vunpack.c.l.b16 %v362
        %v1074 = vunpack.c.l.b16 %v363
        %v1075 = vunpack.c.l.b16 %v364
        %v1076 = vunpack.c.l.b16 %v365
        %v1077 = vunpack.c.l.b16 %v366
        %v1078 = vunpack.c.l.b16 %v367
        %v1079 = vpack.c.b16 %v1048, %v1047
        %v1080 = vpack.c.b16 %v1050, %v1049
        %v1081 = vpack.c.b16 %v1052, %v1051
        %v1082 = vpack.c.b16 %v1054, %v1053
        %v1083 = vpack.c.b16 %v1056, %v1055
        %v1084 = vpack.c.b16 %v1058, %v1057
        %v1085 = vpack.c.b16 %v1060, %v1059
        %v1086 = vpack.c.b16 %v1062, %v1061
        %v1087 = vpack.c.b16 %v1064, %v1063
        %v1088 = vpack.c.b16 %v1066, %v1065
        %v1089 = vpack.c.b16 %v1068, %v1067
        %v1090 = vpack.c.b16 %v1070, %v1069
        %v1091 = vpack.c.b16 %v1072, %v1071
        %v1092 = vpack.c.b16 %v1074, %v1073
        %v1093 = vpack.c.b16 %v1076, %v1075
        %v1094 = vpack.c.b16 %v1078, %v1077
        %1111 = vmatprep.subr.bf16.mxu0 0
        %1112 = vmatpush1.bf16.msra.mxu0 %v1079
        %1113 = vmatprep.subr.bf16.mxu0 0
        %1114 = vmatpush1.bf16.msra.mxu0 %v1080
        %1115 = vmatprep.subr.bf16.mxu0 0
        %1116 = vmatpush1.bf16.msra.mxu0 %v1081
        %1117 = vmatprep.subr.bf16.mxu0 0
        %1118 = vmatpush1.bf16.msra.mxu0 %v1082
        %1119 = vmatprep.subr.bf16.mxu0 0
        %1120 = vmatpush1.bf16.msra.mxu0 %v1083
        %1121 = vmatprep.subr.bf16.mxu0 0
        %1122 = vmatpush1.bf16.msra.mxu0 %v1084
        %1123 = vmatprep.subr.bf16.mxu0 0
        %1124 = vmatpush1.bf16.msra.mxu0 %v1085
        %1125 = vmatprep.subr.bf16.mxu0 0
        %1126 = vmatpush1.bf16.msra.mxu0 %v1086
        %1127 = vmatprep.subr.bf16.mxu0 0
        %1128 = vmatpush1.bf16.msra.mxu0 %v1087
        %1129 = vmatprep.subr.bf16.mxu0 0
        %1130 = vmatpush1.bf16.msra.mxu0 %v1088
        %1131 = vmatprep.subr.bf16.mxu0 0
        %1132 = vmatpush1.bf16.msra.mxu0 %v1089
        %1133 = vmatprep.subr.bf16.mxu0 0
        %1134 = vmatpush1.bf16.msra.mxu0 %v1090
        %1135 = vmatprep.subr.bf16.mxu0 0
        %1136 = vmatpush1.bf16.msra.mxu0 %v1091
        %1137 = vmatprep.subr.bf16.mxu0 0
        %1138 = vmatpush1.bf16.msra.mxu0 %v1092
        %1139 = vmatprep.subr.bf16.mxu0 0
        %1140 = vmatpush1.bf16.msra.mxu0 %v1093
        %1141 = vmatprep.subr.bf16.mxu0 0
        %1142 = vmatpush1.bf16.msra.mxu0 %v1094
        %1143 = vmatprep.mubr.bf16.mxu0 %v760
        %1144 = vmatmul.mubr.bf16.gmra.mrb[0].mxu0 %v759
        %v1145 = vpop.f32.mrb[0].mxu0
        %v1146 = vadd.f32 %v373, %v1145
        %v1147 = vpop.f32.mrb[0].mxu0
        %v1148 = vpop.f32.mrb[0].mxu0
        %v1149 = vadd.f32 %v373, %v1148
        %v1150 = vpop.f32.mrb[0].mxu0
        %1151 = vmatprep.mubr.bf16.mxu0 %v762
        %1152 = vmatmul.mubr.bf16.gmra.mrb[0].mxu0 %v761
        %v1153 = vpop.f32.mrb[0].mxu0
        %v1154 = vadd.f32 %v373, %v1153
        %v1155 = vpop.f32.mrb[0].mxu0
        %v1156 = vpop.f32.mrb[0].mxu0
        %v1157 = vadd.f32 %v373, %v1156
        %v1158 = vpop.f32.mrb[0].mxu0
        %1159 = vmatprep.mubr.bf16.mxu0 %v764
        %1160 = vmatmul.mubr.bf16.gmra.mrb[0].mxu0 %v763
        %v1161 = vpop.f32.mrb[0].mxu0
        %v1162 = vadd.f32 %v373, %v1161
        %v1163 = vpop.f32.mrb[0].mxu0
        %v1164 = vpop.f32.mrb[0].mxu0
        %v1165 = vadd.f32 %v373, %v1164
        %v1166 = vpop.f32.mrb[0].mxu0
        %1167 = vmatprep.mubr.bf16.mxu0 %v766
        %1168 = vmatmul.mubr.bf16.gmra.mrb[0].mxu0 %v765
        %v1169 = vpop.f32.mrb[0].mxu0
        %v1170 = vadd.f32 %v373, %v1169
        %v1171 = vpop.f32.mrb[0].mxu0
        %v1172 = vpop.f32.mrb[0].mxu0
        %v1173 = vadd.f32 %v373, %v1172
        %v1174 = vpop.f32.mrb[0].mxu0
        %1175 = vmatprep.mubr.bf16.mxu0 %v768
        %1176 = vmatmul.mubr.bf16.gmra.mrb[0].mxu0 %v767
        %v1177 = vpop.f32.mrb[0].mxu0
        %v1178 = vadd.f32 %v373, %v1177
        %v1179 = vpop.f32.mrb[0].mxu0
        %v1180 = vpop.f32.mrb[0].mxu0
        %v1181 = vadd.f32 %v373, %v1180
        %v1182 = vpop.f32.mrb[0].mxu0
        %1183 = vmatprep.mubr.bf16.mxu0 %v770
        %1184 = vmatmul.mubr.bf16.gmra.mrb[0].mxu0 %v769
        %v1185 = vpop.f32.mrb[0].mxu0
        %v1186 = vadd.f32 %v373, %v1185
        %v1187 = vpop.f32.mrb[0].mxu0
        %v1188 = vpop.f32.mrb[0].mxu0
        %v1189 = vadd.f32 %v373, %v1188
        %v1190 = vpop.f32.mrb[0].mxu0
        %1191 = vmatprep.mubr.bf16.mxu0 %v772
        %1192 = vmatmul.mubr.bf16.gmra.mrb[0].mxu0 %v771
        %v1193 = vpop.f32.mrb[0].mxu0
        %v1194 = vadd.f32 %v373, %v1193
        %v1195 = vpop.f32.mrb[0].mxu0
        %v1196 = vpop.f32.mrb[0].mxu0
        %v1197 = vadd.f32 %v373, %v1196
        %v1198 = vpop.f32.mrb[0].mxu0
        %1199 = vmatprep.mubr.bf16.mxu0 %v774
        %1200 = vmatmul.mubr.bf16.gmra.mrb[0].mxu0 %v773
        %v1201 = vpop.f32.mrb[0].mxu0
        %v1202 = vadd.f32 %v373, %v1201
        %v1203 = vpop.f32.mrb[0].mxu0
        %v1204 = vpop.f32.mrb[0].mxu0
        %v1205 = vadd.f32 %v373, %v1204
        %v1206 = vpop.f32.mrb[0].mxu0
        %1207 = vmatprep.mubr.bf16.mxu0 %v776
        %1208 = vmatmul.mubr.bf16.gmra.mrb[0].mxu0 %v775
        %v1209 = vpop.f32.mrb[0].mxu0
        %v1210 = vadd.f32 %v373, %v1209
        %v1211 = vpop.f32.mrb[0].mxu0
        %v1212 = vpop.f32.mrb[0].mxu0
        %v1213 = vadd.f32 %v373, %v1212
        %v1214 = vpop.f32.mrb[0].mxu0
        %1215 = vmatprep.mubr.bf16.mxu0 %v778
        %1216 = vmatmul.mubr.bf16.gmra.mrb[0].mxu0 %v777
        %v1217 = vpop.f32.mrb[0].mxu0
        %v1218 = vadd.f32 %v373, %v1217
        %v1219 = vpop.f32.mrb[0].mxu0
        %v1220 = vpop.f32.mrb[0].mxu0
        %v1221 = vadd.f32 %v373, %v1220
        %v1222 = vpop.f32.mrb[0].mxu0
        %1223 = vmatprep.mubr.bf16.mxu0 %v780
        %1224 = vmatmul.mubr.bf16.gmra.mrb[0].mxu0 %v779
        %v1225 = vpop.f32.mrb[0].mxu0
        %v1226 = vadd.f32 %v373, %v1225
        %v1227 = vpop.f32.mrb[0].mxu0
        %v1228 = vpop.f32.mrb[0].mxu0
        %v1229 = vadd.f32 %v373, %v1228
        %v1230 = vpop.f32.mrb[0].mxu0
        %1231 = vmatprep.mubr.bf16.mxu0 %v782
        %1232 = vmatmul.mubr.bf16.gmra.mrb[0].mxu0 %v781
        %v1233 = vpop.f32.mrb[0].mxu0
        %v1234 = vadd.f32 %v373, %v1233
        %v1235 = vpop.f32.mrb[0].mxu0
        %v1236 = vpop.f32.mrb[0].mxu0
        %v1237 = vadd.f32 %v373, %v1236
        %v1238 = vpop.f32.mrb[0].mxu0
        %1239 = vmatprep.mubr.bf16.mxu0 %v784
        %1240 = vmatmul.mubr.bf16.gmra.mrb[0].mxu0 %v783
        %v1241 = vpop.f32.mrb[0].mxu0
        %v1242 = vadd.f32 %v373, %v1241
        %v1243 = vpop.f32.mrb[0].mxu0
        %v1244 = vpop.f32.mrb[0].mxu0
        %v1245 = vadd.f32 %v373, %v1244
        %v1246 = vpop.f32.mrb[0].mxu0
        %1247 = vmatprep.mubr.bf16.mxu0 %v786
        %1248 = vmatmul.mubr.bf16.gmra.mrb[0].mxu0 %v785
        %v1249 = vpop.f32.mrb[0].mxu0
        %v1250 = vadd.f32 %v373, %v1249
        %v1251 = vpop.f32.mrb[0].mxu0
        %v1252 = vpop.f32.mrb[0].mxu0
        %v1253 = vadd.f32 %v373, %v1252
        %v1254 = vpop.f32.mrb[0].mxu0
        %1255 = vmatprep.mubr.bf16.mxu0 %v788
        %1256 = vmatmul.mubr.bf16.gmra.mrb[0].mxu0 %v787
        %v1257 = vpop.f32.mrb[0].mxu0
        %v1258 = vadd.f32 %v373, %v1257
        %v1259 = vpop.f32.mrb[0].mxu0
        %v1260 = vpop.f32.mrb[0].mxu0
        %v1261 = vadd.f32 %v373, %v1260
        %v1262 = vpop.f32.mrb[0].mxu0
        %1263 = vmatprep.mubr.bf16.mxu0 %v790
        %1264 = vmatmul.mubr.bf16.gmra.mrb[0].mxu0 %v789
        %v1265 = vpop.f32.mrb[0].mxu0
        %v1266 = vadd.f32 %v373, %v1265
        %v1267 = vpop.f32.mrb[0].mxu0
        %v1268 = vpop.f32.mrb[0].mxu0
        %v1269 = vadd.f32 %v373, %v1268
        %v1270 = vpop.f32.mrb[0].mxu0
        %1271 = vmatprep.mubr.bf16.mxu0 %v792
        %1272 = vmatmul.mubr.bf16.gmra.mrb[0].mxu0 %v791
        %v1273 = vpop.f32.mrb[0].mxu0
        %v1274 = vadd.f32 %v373, %v1273
        %v1275 = vpop.f32.mrb[0].mxu0
        %v1276 = vpop.f32.mrb[0].mxu0
        %v1277 = vadd.f32 %v373, %v1276
        %v1278 = vpop.f32.mrb[0].mxu0
        %1279 = vmatprep.mubr.bf16.mxu0 %v794
        %1280 = vmatmul.mubr.bf16.gmra.mrb[0].mxu0 %v793
        %v1281 = vpop.f32.mrb[0].mxu0
        %v1282 = vadd.f32 %v373, %v1281
        %v1283 = vpop.f32.mrb[0].mxu0
        %v1284 = vpop.f32.mrb[0].mxu0
        %v1285 = vadd.f32 %v373, %v1284
        %v1286 = vpop.f32.mrb[0].mxu0
        %1287 = vmatprep.mubr.bf16.mxu0 %v796
        %1288 = vmatmul.mubr.bf16.gmra.mrb[0].mxu0 %v795
        %v1289 = vpop.f32.mrb[0].mxu0
        %v1290 = vadd.f32 %v373, %v1289
        %v1291 = vpop.f32.mrb[0].mxu0
        %v1292 = vpop.f32.mrb[0].mxu0
        %v1293 = vadd.f32 %v373, %v1292
        %v1294 = vpop.f32.mrb[0].mxu0
        %1295 = vmatprep.mubr.bf16.mxu0 %v798
        %1296 = vmatmul.mubr.bf16.gmra.mrb[0].mxu0 %v797
        %v1297 = vpop.f32.mrb[0].mxu0
        %v1298 = vadd.f32 %v373, %v1297
        %v1299 = vpop.f32.mrb[0].mxu0
        %v1300 = vpop.f32.mrb[0].mxu0
        %v1301 = vadd.f32 %v373, %v1300
        %v1302 = vpop.f32.mrb[0].mxu0
        %1303 = vmatprep.mubr.bf16.mxu0 %v800
        %1304 = vmatmul.mubr.bf16.gmra.mrb[0].mxu0 %v799
        %v1305 = vpop.f32.mrb[0].mxu0
        %v1306 = vadd.f32 %v373, %v1305
        %v1307 = vpop.f32.mrb[0].mxu0
        %v1308 = vpop.f32.mrb[0].mxu0
        %v1309 = vadd.f32 %v373, %v1308
        %v1310 = vpop.f32.mrb[0].mxu0
        %1311 = vmatprep.mubr.bf16.mxu0 %v802
        %1312 = vmatmul.mubr.bf16.gmra.mrb[0].mxu0 %v801
        %v1313 = vpop.f32.mrb[0].mxu0
        %v1314 = vadd.f32 %v373, %v1313
        %v1315 = vpop.f32.mrb[0].mxu0
        %v1316 = vpop.f32.mrb[0].mxu0
        %v1317 = vadd.f32 %v373, %v1316
        %v1318 = vpop.f32.mrb[0].mxu0
        %1319 = vmatprep.mubr.bf16.mxu0 %v804
        %1320 = vmatmul.mubr.bf16.gmra.mrb[0].mxu0 %v803
        %v1321 = vpop.f32.mrb[0].mxu0
        %v1322 = vadd.f32 %v373, %v1321
        %v1323 = vpop.f32.mrb[0].mxu0
        %v1324 = vpop.f32.mrb[0].mxu0
        %v1325 = vadd.f32 %v373, %v1324
        %v1326 = vpop.f32.mrb[0].mxu0
        %1327 = vmatprep.mubr.bf16.mxu0 %v806
        %1328 = vmatmul.mubr.bf16.gmra.mrb[0].mxu0 %v805
        %v1329 = vpop.f32.mrb[0].mxu0
        %v1330 = vadd.f32 %v373, %v1329
        %v1331 = vpop.f32.mrb[0].mxu0
        %v1332 = vpop.f32.mrb[0].mxu0
        %v1333 = vadd.f32 %v373, %v1332
        %v1334 = vpop.f32.mrb[0].mxu0
        %1335 = vmatprep.mubr.bf16.mxu0 %v808
        %1336 = vmatmul.mubr.bf16.gmra.mrb[0].mxu0 %v807
        %v1337 = vpop.f32.mrb[0].mxu0
        %v1338 = vadd.f32 %v373, %v1337
        %v1339 = vpop.f32.mrb[0].mxu0
        %v1340 = vpop.f32.mrb[0].mxu0
        %v1341 = vadd.f32 %v373, %v1340
        %v1342 = vpop.f32.mrb[0].mxu0
        %1343 = vmatprep.mubr.bf16.mxu0 %v810
        %1344 = vmatmul.mubr.bf16.gmra.mrb[0].mxu0 %v809
        %v1345 = vpop.f32.mrb[0].mxu0
        %v1346 = vadd.f32 %v373, %v1345
        %v1347 = vpop.f32.mrb[0].mxu0
        %v1348 = vpop.f32.mrb[0].mxu0
        %v1349 = vadd.f32 %v373, %v1348
        %v1350 = vpop.f32.mrb[0].mxu0
        %1351 = vmatprep.mubr.bf16.mxu0 %v812
        %1352 = vmatmul.mubr.bf16.gmra.mrb[0].mxu0 %v811
        %v1353 = vpop.f32.mrb[0].mxu0
        %v1354 = vadd.f32 %v373, %v1353
        %v1355 = vpop.f32.mrb[0].mxu0
        %v1356 = vpop.f32.mrb[0].mxu0
        %v1357 = vadd.f32 %v373, %v1356
        %v1358 = vpop.f32.mrb[0].mxu0
        %1359 = vmatprep.mubr.bf16.mxu0 %v814
        %1360 = vmatmul.mubr.bf16.gmra.mrb[0].mxu0 %v813
        %v1361 = vpop.f32.mrb[0].mxu0
        %v1362 = vadd.f32 %v373, %v1361
        %v1363 = vpop.f32.mrb[0].mxu0
        %v1364 = vpop.f32.mrb[0].mxu0
        %v1365 = vadd.f32 %v373, %v1364
        %v1366 = vpop.f32.mrb[0].mxu0
        %1367 = vmatprep.mubr.bf16.mxu0 %v816
        %1368 = vmatmul.mubr.bf16.gmra.mrb[0].mxu0 %v815
        %v1369 = vpop.f32.mrb[0].mxu0
        %v1370 = vadd.f32 %v373, %v1369
        %v1371 = vpop.f32.mrb[0].mxu0
        %v1372 = vpop.f32.mrb[0].mxu0
        %v1373 = vadd.f32 %v373, %v1372
        %v1374 = vpop.f32.mrb[0].mxu0
        %1375 = vmatprep.mubr.bf16.mxu0 %v818
        %1376 = vmatmul.mubr.bf16.gmra.mrb[0].mxu0 %v817
        %v1377 = vpop.f32.mrb[0].mxu0
        %v1378 = vadd.f32 %v373, %v1377
        %v1379 = vpop.f32.mrb[0].mxu0
        %v1380 = vpop.f32.mrb[0].mxu0
        %v1381 = vadd.f32 %v373, %v1380
        %v1382 = vpop.f32.mrb[0].mxu0
        %1383 = vmatprep.mubr.bf16.mxu0 %v820
        %1384 = vmatmul.mubr.bf16.gmra.mrb[0].mxu0 %v819
        %v1385 = vpop.f32.mrb[0].mxu0
        %v1386 = vadd.f32 %v373, %v1385
        %v1387 = vpop.f32.mrb[0].mxu0
        %v1388 = vpop.f32.mrb[0].mxu0
        %v1389 = vadd.f32 %v373, %v1388
        %v1390 = vpop.f32.mrb[0].mxu0
        %1391 = vmatprep.mubr.bf16.mxu0 %v822
        %1392 = vmatmul.mubr.bf16.gmra.mrb[0].mxu0 %v821
        %v1393 = vpop.f32.mrb[0].mxu0
        %v1394 = vadd.f32 %v373, %v1393
        %v1395 = vpop.f32.mrb[0].mxu0
        %v1396 = vpop.f32.mrb[0].mxu0
        %v1397 = vadd.f32 %v373, %v1396
        %v1398 = vpop.f32.mrb[0].mxu0
        %1399 = vmatprep.mubr.bf16.mxu0 %v824
        %1400 = vmatmul.mubr.bf16.gmra.mrb[0].mxu0 %v823
        %v1401 = vpop.f32.mrb[0].mxu0
        %v1402 = vadd.f32 %v373, %v1401
        %v1403 = vpop.f32.mrb[0].mxu0
        %v1404 = vpop.f32.mrb[0].mxu0
        %v1405 = vadd.f32 %v373, %v1404
        %v1406 = vpop.f32.mrb[0].mxu0
        %1407 = vmatprep.mubr.bf16.mxu0 %v826
        %1408 = vmatmul.mubr.bf16.gmra.mrb[0].mxu0 %v825
        %v1409 = vpop.f32.mrb[0].mxu0
        %v1410 = vadd.f32 %v373, %v1409
        %v1411 = vpop.f32.mrb[0].mxu0
        %v1412 = vpop.f32.mrb[0].mxu0
        %v1413 = vadd.f32 %v373, %v1412
        %v1414 = vpop.f32.mrb[0].mxu0
        %1415 = vmatprep.mubr.bf16.mxu0 %v828
        %1416 = vmatmul.mubr.bf16.gmra.mrb[0].mxu0 %v827
        %v1417 = vpop.f32.mrb[0].mxu0
        %v1418 = vadd.f32 %v373, %v1417
        %v1419 = vpop.f32.mrb[0].mxu0
        %v1420 = vpop.f32.mrb[0].mxu0
        %v1421 = vadd.f32 %v373, %v1420
        %v1422 = vpop.f32.mrb[0].mxu0
        %1423 = vmatprep.mubr.bf16.mxu0 %v830
        %1424 = vmatmul.mubr.bf16.gmra.mrb[0].mxu0 %v829
        %v1425 = vpop.f32.mrb[0].mxu0
        %v1426 = vadd.f32 %v373, %v1425
        %v1427 = vpop.f32.mrb[0].mxu0
        %v1428 = vpop.f32.mrb[0].mxu0
        %v1429 = vadd.f32 %v373, %v1428
        %v1430 = vpop.f32.mrb[0].mxu0
        %1431 = vmatprep.mubr.bf16.mxu0 %v832
        %1432 = vmatmul.mubr.bf16.gmra.mrb[0].mxu0 %v831
        %v1433 = vpop.f32.mrb[0].mxu0
        %v1434 = vadd.f32 %v373, %v1433
        %v1435 = vpop.f32.mrb[0].mxu0
        %v1436 = vpop.f32.mrb[0].mxu0
        %v1437 = vadd.f32 %v373, %v1436
        %v1438 = vpop.f32.mrb[0].mxu0
        %1439 = vmatprep.mubr.bf16.mxu0 %v834
        %1440 = vmatmul.mubr.bf16.gmra.mrb[0].mxu0 %v833
        %v1441 = vpop.f32.mrb[0].mxu0
        %v1442 = vadd.f32 %v373, %v1441
        %v1443 = vpop.f32.mrb[0].mxu0
        %v1444 = vpop.f32.mrb[0].mxu0
        %v1445 = vadd.f32 %v373, %v1444
        %v1446 = vpop.f32.mrb[0].mxu0
        %1447 = vmatprep.mubr.bf16.mxu0 %v836
        %1448 = vmatmul.mubr.bf16.gmra.mrb[0].mxu0 %v835
        %v1449 = vpop.f32.mrb[0].mxu0
        %v1450 = vadd.f32 %v373, %v1449
        %v1451 = vpop.f32.mrb[0].mxu0
        %v1452 = vpop.f32.mrb[0].mxu0
        %v1453 = vadd.f32 %v373, %v1452
        %v1454 = vpop.f32.mrb[0].mxu0
        %1455 = vmatprep.mubr.bf16.mxu0 %v838
        %1456 = vmatmul.mubr.bf16.gmra.mrb[0].mxu0 %v837
        %v1457 = vpop.f32.mrb[0].mxu0
        %v1458 = vadd.f32 %v373, %v1457
        %v1459 = vpop.f32.mrb[0].mxu0
        %v1460 = vpop.f32.mrb[0].mxu0
        %v1461 = vadd.f32 %v373, %v1460
        %v1462 = vpop.f32.mrb[0].mxu0
        %1463 = vmatprep.mubr.bf16.mxu0 %v840
        %1464 = vmatmul.mubr.bf16.gmra.mrb[0].mxu0 %v839
        %v1465 = vpop.f32.mrb[0].mxu0
        %v1466 = vadd.f32 %v373, %v1465
        %v1467 = vpop.f32.mrb[0].mxu0
        %v1468 = vpop.f32.mrb[0].mxu0
        %v1469 = vadd.f32 %v373, %v1468
        %v1470 = vpop.f32.mrb[0].mxu0
        %1471 = vmatprep.mubr.bf16.mxu0 %v842
        %1472 = vmatmul.mubr.bf16.gmra.mrb[0].mxu0 %v841
        %v1473 = vpop.f32.mrb[0].mxu0
        %v1474 = vadd.f32 %v373, %v1473
        %v1475 = vpop.f32.mrb[0].mxu0
        %v1476 = vpop.f32.mrb[0].mxu0
        %v1477 = vadd.f32 %v373, %v1476
        %v1478 = vpop.f32.mrb[0].mxu0
        %1479 = vmatprep.mubr.bf16.mxu0 %v844
        %1480 = vmatmul.mubr.bf16.gmra.mrb[0].mxu0 %v843
        %v1481 = vpop.f32.mrb[0].mxu0
        %v1482 = vadd.f32 %v373, %v1481
        %v1483 = vpop.f32.mrb[0].mxu0
        %v1484 = vpop.f32.mrb[0].mxu0
        %v1485 = vadd.f32 %v373, %v1484
        %v1486 = vpop.f32.mrb[0].mxu0
        %1487 = vmatprep.mubr.bf16.mxu0 %v846
        %1488 = vmatmul.mubr.bf16.gmra.mrb[0].mxu0 %v845
        %v1489 = vpop.f32.mrb[0].mxu0
        %v1490 = vadd.f32 %v373, %v1489
        %v1491 = vpop.f32.mrb[0].mxu0
        %v1492 = vpop.f32.mrb[0].mxu0
        %v1493 = vadd.f32 %v373, %v1492
        %v1494 = vpop.f32.mrb[0].mxu0
        %1495 = vmatprep.mubr.bf16.mxu0 %v848
        %1496 = vmatmul.mubr.bf16.gmra.mrb[0].mxu0 %v847
        %v1497 = vpop.f32.mrb[0].mxu0
        %v1498 = vadd.f32 %v373, %v1497
        %v1499 = vpop.f32.mrb[0].mxu0
        %v1500 = vpop.f32.mrb[0].mxu0
        %v1501 = vadd.f32 %v373, %v1500
        %v1502 = vpop.f32.mrb[0].mxu0
        %1503 = vmatprep.mubr.bf16.mxu0 %v850
        %1504 = vmatmul.mubr.bf16.gmra.mrb[0].mxu0 %v849
        %v1505 = vpop.f32.mrb[0].mxu0
        %v1506 = vadd.f32 %v373, %v1505
        %v1507 = vpop.f32.mrb[0].mxu0
        %v1508 = vpop.f32.mrb[0].mxu0
        %v1509 = vadd.f32 %v373, %v1508
        %v1510 = vpop.f32.mrb[0].mxu0
        %1511 = vmatprep.mubr.bf16.mxu0 %v852
        %1512 = vmatmul.mubr.bf16.gmra.mrb[0].mxu0 %v851
        %v1513 = vpop.f32.mrb[0].mxu0
        %v1514 = vadd.f32 %v373, %v1513
        %v1515 = vpop.f32.mrb[0].mxu0
        %v1516 = vpop.f32.mrb[0].mxu0
        %v1517 = vadd.f32 %v373, %v1516
        %v1518 = vpop.f32.mrb[0].mxu0
        %1519 = vmatprep.mubr.bf16.mxu0 %v854
        %1520 = vmatmul.mubr.bf16.gmra.mrb[0].mxu0 %v853
        %v1521 = vpop.f32.mrb[0].mxu0
        %v1522 = vadd.f32 %v373, %v1521
        %v1523 = vpop.f32.mrb[0].mxu0
        %v1524 = vpop.f32.mrb[0].mxu0
        %v1525 = vadd.f32 %v373, %v1524
        %v1526 = vpop.f32.mrb[0].mxu0
        %1527 = vmatprep.mubr.bf16.mxu0 %v856
        %1528 = vmatmul.mubr.bf16.gmra.mrb[0].mxu0 %v855
        %v1529 = vpop.f32.mrb[0].mxu0
        %v1530 = vadd.f32 %v373, %v1529
        %v1531 = vpop.f32.mrb[0].mxu0
        %v1532 = vpop.f32.mrb[0].mxu0
        %v1533 = vadd.f32 %v373, %v1532
        %v1534 = vpop.f32.mrb[0].mxu0
        %1535 = vmatprep.mubr.bf16.mxu0 %v858
        %1536 = vmatmul.mubr.bf16.gmra.mrb[0].mxu0 %v857
        %v1537 = vpop.f32.mrb[0].mxu0
        %v1538 = vadd.f32 %v373, %v1537
        %v1539 = vpop.f32.mrb[0].mxu0
        %v1540 = vpop.f32.mrb[0].mxu0
        %v1541 = vadd.f32 %v373, %v1540
        %v1542 = vpop.f32.mrb[0].mxu0
        %1543 = vmatprep.mubr.bf16.mxu0 %v860
        %1544 = vmatmul.mubr.bf16.gmra.mrb[0].mxu0 %v859
        %v1545 = vpop.f32.mrb[0].mxu0
        %v1546 = vadd.f32 %v373, %v1545
        %v1547 = vpop.f32.mrb[0].mxu0
        %v1548 = vpop.f32.mrb[0].mxu0
        %v1549 = vadd.f32 %v373, %v1548
        %v1550 = vpop.f32.mrb[0].mxu0
        %1551 = vmatprep.mubr.bf16.mxu0 %v862
        %1552 = vmatmul.mubr.bf16.gmra.mrb[0].mxu0 %v861
        %v1553 = vpop.f32.mrb[0].mxu0
        %v1554 = vadd.f32 %v373, %v1553
        %v1555 = vpop.f32.mrb[0].mxu0
        %v1556 = vpop.f32.mrb[0].mxu0
        %v1557 = vadd.f32 %v373, %v1556
        %v1558 = vpop.f32.mrb[0].mxu0
        %1559 = vmatprep.mubr.bf16.mxu0 %v864
        %1560 = vmatmul.mubr.bf16.gmra.mrb[0].mxu0 %v863
        %v1561 = vpop.f32.mrb[0].mxu0
        %v1562 = vadd.f32 %v373, %v1561
        %v1563 = vpop.f32.mrb[0].mxu0
        %v1564 = vpop.f32.mrb[0].mxu0
        %v1565 = vadd.f32 %v373, %v1564
        %v1566 = vpop.f32.mrb[0].mxu0
        %1567 = vmatprep.mubr.bf16.mxu0 %v866
        %1568 = vmatmul.mubr.bf16.gmra.mrb[0].mxu0 %v865
        %v1569 = vpop.f32.mrb[0].mxu0
        %v1570 = vadd.f32 %v373, %v1569
        %v1571 = vpop.f32.mrb[0].mxu0
        %v1572 = vpop.f32.mrb[0].mxu0
        %v1573 = vadd.f32 %v373, %v1572
        %v1574 = vpop.f32.mrb[0].mxu0
        %1575 = vmatprep.mubr.bf16.mxu0 %v868
        %1576 = vmatmul.mubr.bf16.gmra.mrb[0].mxu0 %v867
        %v1577 = vpop.f32.mrb[0].mxu0
        %v1578 = vadd.f32 %v373, %v1577
        %v1579 = vpop.f32.mrb[0].mxu0
        %v1580 = vpop.f32.mrb[0].mxu0
        %v1581 = vadd.f32 %v373, %v1580
        %v1582 = vpop.f32.mrb[0].mxu0
        %1583 = vmatprep.mubr.bf16.mxu0 %v870
        %1584 = vmatmul.mubr.bf16.gmra.mrb[0].mxu0 %v869
        %v1585 = vpop.f32.mrb[0].mxu0
        %v1586 = vadd.f32 %v373, %v1585
        %v1587 = vpop.f32.mrb[0].mxu0
        %v1588 = vpop.f32.mrb[0].mxu0
        %v1589 = vadd.f32 %v373, %v1588
        %v1590 = vpop.f32.mrb[0].mxu0
        %1591 = vmatprep.mubr.bf16.mxu0 %v872
        %1592 = vmatmul.mubr.bf16.gmra.mrb[0].mxu0 %v871
        %v1593 = vpop.f32.mrb[0].mxu0
        %v1594 = vadd.f32 %v373, %v1593
        %v1595 = vpop.f32.mrb[0].mxu0
        %v1596 = vpop.f32.mrb[0].mxu0
        %v1597 = vadd.f32 %v373, %v1596
        %v1598 = vpop.f32.mrb[0].mxu0
        %1599 = vmatprep.mubr.bf16.mxu0 %v874
        %1600 = vmatmul.mubr.bf16.gmra.mrb[0].mxu0 %v873
        %v1601 = vpop.f32.mrb[0].mxu0
        %v1602 = vadd.f32 %v373, %v1601
        %v1603 = vpop.f32.mrb[0].mxu0
        %v1604 = vpop.f32.mrb[0].mxu0
        %v1605 = vadd.f32 %v373, %v1604
        %v1606 = vpop.f32.mrb[0].mxu0
        %1607 = vmatprep.mubr.bf16.mxu0 %v876
        %1608 = vmatmul.mubr.bf16.gmra.mrb[0].mxu0 %v875
        %v1609 = vpop.f32.mrb[0].mxu0
        %v1610 = vadd.f32 %v373, %v1609
        %v1611 = vpop.f32.mrb[0].mxu0
        %v1612 = vpop.f32.mrb[0].mxu0
        %v1613 = vadd.f32 %v373, %v1612
        %v1614 = vpop.f32.mrb[0].mxu0
        %1615 = vmatprep.mubr.bf16.mxu0 %v878
        %1616 = vmatmul.mubr.bf16.gmra.mrb[0].mxu0 %v877
        %v1617 = vpop.f32.mrb[0].mxu0
        %v1618 = vadd.f32 %v373, %v1617
        %v1619 = vpop.f32.mrb[0].mxu0
        %v1620 = vpop.f32.mrb[0].mxu0
        %v1621 = vadd.f32 %v373, %v1620
        %v1622 = vpop.f32.mrb[0].mxu0
        %1623 = vmatprep.mubr.bf16.mxu0 %v880
        %1624 = vmatmul.mubr.bf16.gmra.mrb[0].mxu0 %v879
        %v1625 = vpop.f32.mrb[0].mxu0
        %v1626 = vadd.f32 %v373, %v1625
        %v1627 = vpop.f32.mrb[0].mxu0
        %v1628 = vpop.f32.mrb[0].mxu0
        %v1629 = vadd.f32 %v373, %v1628
        %v1630 = vpop.f32.mrb[0].mxu0
        %1631 = vmatprep.mubr.bf16.mxu0 %v882
        %1632 = vmatmul.mubr.bf16.gmra.mrb[0].mxu0 %v881
        %v1633 = vpop.f32.mrb[0].mxu0
        %v1634 = vadd.f32 %v373, %v1633
        %v1635 = vpop.f32.mrb[0].mxu0
        %v1636 = vpop.f32.mrb[0].mxu0
        %v1637 = vadd.f32 %v373, %v1636
        %v1638 = vpop.f32.mrb[0].mxu0
        %1639 = vmatprep.mubr.bf16.mxu0 %v884
        %1640 = vmatmul.mubr.bf16.gmra.mrb[0].mxu0 %v883
        %v1641 = vpop.f32.mrb[0].mxu0
        %v1642 = vadd.f32 %v373, %v1641
        %v1643 = vpop.f32.mrb[0].mxu0
        %v1644 = vpop.f32.mrb[0].mxu0
        %v1645 = vadd.f32 %v373, %v1644
        %v1646 = vpop.f32.mrb[0].mxu0
        %1647 = vmatprep.mubr.bf16.mxu0 %v886
        %1648 = vmatmul.mubr.bf16.gmra.mrb[0].mxu0 %v885
        %v1649 = vpop.f32.mrb[0].mxu0
        %v1650 = vadd.f32 %v373, %v1649
        %v1651 = vpop.f32.mrb[0].mxu0
        %v1652 = vpop.f32.mrb[0].mxu0
        %v1653 = vadd.f32 %v373, %v1652
        %v1654 = vpop.f32.mrb[0].mxu0
        %1655 = vdwg.mxu0
        %v1656 = vmax.f32 %v1146, 0.0
        %v1657 = vmax.f32 %v1149, 0.0
        %v1658 = vmax.f32 %v1154, 0.0
        %v1659 = vmax.f32 %v1157, 0.0
        %v1660 = vmax.f32 %v1162, 0.0
        %v1661 = vmax.f32 %v1165, 0.0
        %v1662 = vmax.f32 %v1170, 0.0
        %v1663 = vmax.f32 %v1173, 0.0
        %v1664 = vmax.f32 %v1178, 0.0
        %v1665 = vmax.f32 %v1181, 0.0
        %v1666 = vmax.f32 %v1186, 0.0
        %v1667 = vmax.f32 %v1189, 0.0
        %v1668 = vmax.f32 %v1194, 0.0
        %v1669 = vmax.f32 %v1197, 0.0
        %v1670 = vmax.f32 %v1202, 0.0
        %v1671 = vmax.f32 %v1205, 0.0
        %v1672 = vmax.f32 %v1210, 0.0
        %v1673 = vmax.f32 %v1213, 0.0
        %v1674 = vmax.f32 %v1218, 0.0
        %v1675 = vmax.f32 %v1221, 0.0
        %v1676 = vmax.f32 %v1226, 0.0
        %v1677 = vmax.f32 %v1229, 0.0
        %v1678 = vmax.f32 %v1234, 0.0
        %v1679 = vmax.f32 %v1237, 0.0
        %v1680 = vmax.f32 %v1242, 0.0
        %v1681 = vmax.f32 %v1245, 0.0
        %v1682 = vmax.f32 %v1250, 0.0
        %v1683 = vmax.f32 %v1253, 0.0
        %v1684 = vmax.f32 %v1258, 0.0
        %v1685 = vmax.f32 %v1261, 0.0
        %v1686 = vmax.f32 %v1266, 0.0
        %v1687 = vmax.f32 %v1269, 0.0
        %v1688 = vmax.f32 %v1274, 0.0
        %v1689 = vmax.f32 %v1277, 0.0
        %v1690 = vmax.f32 %v1282, 0.0
        %v1691 = vmax.f32 %v1285, 0.0
        %v1692 = vmax.f32 %v1290, 0.0
        %v1693 = vmax.f32 %v1293, 0.0
        %v1694 = vmax.f32 %v1298, 0.0
        %v1695 = vmax.f32 %v1301, 0.0
        %v1696 = vmax.f32 %v1306, 0.0
        %v1697 = vmax.f32 %v1309, 0.0
        %v1698 = vmax.f32 %v1314, 0.0
        %v1699 = vmax.f32 %v1317, 0.0
        %v1700 = vmax.f32 %v1322, 0.0
        %v1701 = vmax.f32 %v1325, 0.0
        %v1702 = vmax.f32 %v1330, 0.0
        %v1703 = vmax.f32 %v1333, 0.0
        %v1704 = vmax.f32 %v1338, 0.0
        %v1705 = vmax.f32 %v1341, 0.0
        %v1706 = vmax.f32 %v1346, 0.0
        %v1707 = vmax.f32 %v1349, 0.0
        %v1708 = vmax.f32 %v1354, 0.0
        %v1709 = vmax.f32 %v1357, 0.0
        %v1710 = vmax.f32 %v1362, 0.0
        %v1711 = vmax.f32 %v1365, 0.0
        %v1712 = vmax.f32 %v1370, 0.0
        %v1713 = vmax.f32 %v1373, 0.0
        %v1714 = vmax.f32 %v1378, 0.0
        %v1715 = vmax.f32 %v1381, 0.0
        %v1716 = vmax.f32 %v1386, 0.0
        %v1717 = vmax.f32 %v1389, 0.0
        %v1718 = vmax.f32 %v1394, 0.0
        %v1719 = vmax.f32 %v1397, 0.0
        %v1720 = vmax.f32 %v1402, 0.0
        %v1721 = vmax.f32 %v1405, 0.0
        %v1722 = vmax.f32 %v1410, 0.0
        %v1723 = vmax.f32 %v1413, 0.0
        %v1724 = vmax.f32 %v1418, 0.0
        %v1725 = vmax.f32 %v1421, 0.0
        %v1726 = vmax.f32 %v1426, 0.0
        %v1727 = vmax.f32 %v1429, 0.0
        %v1728 = vmax.f32 %v1434, 0.0
        %v1729 = vmax.f32 %v1437, 0.0
        %v1730 = vmax.f32 %v1442, 0.0
        %v1731 = vmax.f32 %v1445, 0.0
        %v1732 = vmax.f32 %v1450, 0.0
        %v1733 = vmax.f32 %v1453, 0.0
        %v1734 = vmax.f32 %v1458, 0.0
        %v1735 = vmax.f32 %v1461, 0.0
        %v1736 = vmax.f32 %v1466, 0.0
        %v1737 = vmax.f32 %v1469, 0.0
        %v1738 = vmax.f32 %v1474, 0.0
        %v1739 = vmax.f32 %v1477, 0.0
        %v1740 = vmax.f32 %v1482, 0.0
        %v1741 = vmax.f32 %v1485, 0.0
        %v1742 = vmax.f32 %v1490, 0.0
        %v1743 = vmax.f32 %v1493, 0.0
        %v1744 = vmax.f32 %v1498, 0.0
        %v1745 = vmax.f32 %v1501, 0.0
        %v1746 = vmax.f32 %v1506, 0.0
        %v1747 = vmax.f32 %v1509, 0.0
        %v1748 = vmax.f32 %v1514, 0.0
        %v1749 = vmax.f32 %v1517, 0.0
        %v1750 = vmax.f32 %v1522, 0.0
        %v1751 = vmax.f32 %v1525, 0.0
        %v1752 = vmax.f32 %v1530, 0.0
        %v1753 = vmax.f32 %v1533, 0.0
        %v1754 = vmax.f32 %v1538, 0.0
        %v1755 = vmax.f32 %v1541, 0.0
        %v1756 = vmax.f32 %v1546, 0.0
        %v1757 = vmax.f32 %v1549, 0.0
        %v1758 = vmax.f32 %v1554, 0.0
        %v1759 = vmax.f32 %v1557, 0.0
        %v1760 = vmax.f32 %v1562, 0.0
        %v1761 = vmax.f32 %v1565, 0.0
        %v1762 = vmax.f32 %v1570, 0.0
        %v1763 = vmax.f32 %v1573, 0.0
        %v1764 = vmax.f32 %v1578, 0.0
        %v1765 = vmax.f32 %v1581, 0.0
        %v1766 = vmax.f32 %v1586, 0.0
        %v1767 = vmax.f32 %v1589, 0.0
        %v1768 = vmax.f32 %v1594, 0.0
        %v1769 = vmax.f32 %v1597, 0.0
        %v1770 = vmax.f32 %v1602, 0.0
        %v1771 = vmax.f32 %v1605, 0.0
        %v1772 = vmax.f32 %v1610, 0.0
        %v1773 = vmax.f32 %v1613, 0.0
        %v1774 = vmax.f32 %v1618, 0.0
        %v1775 = vmax.f32 %v1621, 0.0
        %v1776 = vmax.f32 %v1626, 0.0
        %v1777 = vmax.f32 %v1629, 0.0
        %v1778 = vmax.f32 %v1634, 0.0
        %v1779 = vmax.f32 %v1637, 0.0
        %v1780 = vmax.f32 %v1642, 0.0
        %v1781 = vmax.f32 %v1645, 0.0
        %v1782 = vmax.f32 %v1650, 0.0
        %v1783 = vmax.f32 %v1653, 0.0
        %v1784 = vpack.c.bf16 %v1657, %v1656
        %v1785 = vpack.c.bf16 %v1659, %v1658
        %v1786 = vpack.c.bf16 %v1661, %v1660
        %v1787 = vpack.c.bf16 %v1663, %v1662
        %v1788 = vpack.c.bf16 %v1665, %v1664
        %v1789 = vpack.c.bf16 %v1667, %v1666
        %v1790 = vpack.c.bf16 %v1669, %v1668
        %v1791 = vpack.c.bf16 %v1671, %v1670
        %v1792 = vpack.c.bf16 %v1673, %v1672
        %v1793 = vpack.c.bf16 %v1675, %v1674
        %v1794 = vpack.c.bf16 %v1677, %v1676
        %v1795 = vpack.c.bf16 %v1679, %v1678
        %v1796 = vpack.c.bf16 %v1681, %v1680
        %v1797 = vpack.c.bf16 %v1683, %v1682
        %v1798 = vpack.c.bf16 %v1685, %v1684
        %v1799 = vpack.c.bf16 %v1687, %v1686
        %v1800 = vpack.c.bf16 %v1689, %v1688
        %v1801 = vpack.c.bf16 %v1691, %v1690
        %v1802 = vpack.c.bf16 %v1693, %v1692
        %v1803 = vpack.c.bf16 %v1695, %v1694
        %v1804 = vpack.c.bf16 %v1697, %v1696
        %v1805 = vpack.c.bf16 %v1699, %v1698
        %v1806 = vpack.c.bf16 %v1701, %v1700
        %v1807 = vpack.c.bf16 %v1703, %v1702
        %v1808 = vpack.c.bf16 %v1705, %v1704
        %v1809 = vpack.c.bf16 %v1707, %v1706
        %v1810 = vpack.c.bf16 %v1709, %v1708
        %v1811 = vpack.c.bf16 %v1711, %v1710
        %v1812 = vpack.c.bf16 %v1713, %v1712
        %v1813 = vpack.c.bf16 %v1715, %v1714
        %v1814 = vpack.c.bf16 %v1717, %v1716
        %v1815 = vpack.c.bf16 %v1719, %v1718
        %v1816 = vpack.c.bf16 %v1721, %v1720
        %v1817 = vpack.c.bf16 %v1723, %v1722
        %v1818 = vpack.c.bf16 %v1725, %v1724
        %v1819 = vpack.c.bf16 %v1727, %v1726
        %v1820 = vpack.c.bf16 %v1729, %v1728
        %v1821 = vpack.c.bf16 %v1731, %v1730
        %v1822 = vpack.c.bf16 %v1733, %v1732
        %v1823 = vpack.c.bf16 %v1735, %v1734
        %v1824 = vpack.c.bf16 %v1737, %v1736
        %v1825 = vpack.c.bf16 %v1739, %v1738
        %v1826 = vpack.c.bf16 %v1741, %v1740
        %v1827 = vpack.c.bf16 %v1743, %v1742
        %v1828 = vpack.c.bf16 %v1745, %v1744
        %v1829 = vpack.c.bf16 %v1747, %v1746
        %v1830 = vpack.c.bf16 %v1749, %v1748
        %v1831 = vpack.c.bf16 %v1751, %v1750
        %v1832 = vpack.c.bf16 %v1753, %v1752
        %v1833 = vpack.c.bf16 %v1755, %v1754
        %v1834 = vpack.c.bf16 %v1757, %v1756
        %v1835 = vpack.c.bf16 %v1759, %v1758
        %v1836 = vpack.c.bf16 %v1761, %v1760
        %v1837 = vpack.c.bf16 %v1763, %v1762
        %v1838 = vpack.c.bf16 %v1765, %v1764
        %v1839 = vpack.c.bf16 %v1767, %v1766
        %v1840 = vpack.c.bf16 %v1769, %v1768
        %v1841 = vpack.c.bf16 %v1771, %v1770
        %v1842 = vpack.c.bf16 %v1773, %v1772
        %v1843 = vpack.c.bf16 %v1775, %v1774
        %v1844 = vpack.c.bf16 %v1777, %v1776
        %v1845 = vpack.c.bf16 %v1779, %v1778
        %v1846 = vpack.c.bf16 %v1781, %v1780
        %v1847 = vpack.c.bf16 %v1783, %v1782
        %v1912 = vunpack.c.l.b16 %v1784
        %v1913 = vunpack.c.h.b16 %v1784
        %v1914 = vunpack.c.l.b16 %v1785
        %v1915 = vunpack.c.h.b16 %v1785
        %v1916 = vunpack.c.l.b16 %v1786
        %v1917 = vunpack.c.h.b16 %v1786
        %v1918 = vunpack.c.l.b16 %v1787
        %v1919 = vunpack.c.h.b16 %v1787
        %v1920 = vunpack.c.l.b16 %v1788
        %v1921 = vunpack.c.h.b16 %v1788
        %v1922 = vunpack.c.l.b16 %v1789
        %v1923 = vunpack.c.h.b16 %v1789
        %v1924 = vunpack.c.l.b16 %v1790
        %v1925 = vunpack.c.h.b16 %v1790
        %v1926 = vunpack.c.l.b16 %v1791
        %v1927 = vunpack.c.h.b16 %v1791
        %v1928 = vunpack.c.l.b16 %v1792
        %v1929 = vunpack.c.h.b16 %v1792
        %v1930 = vunpack.c.l.b16 %v1793
        %v1931 = vunpack.c.h.b16 %v1793
        %v1932 = vunpack.c.l.b16 %v1794
        %v1933 = vunpack.c.h.b16 %v1794
        %v1934 = vunpack.c.l.b16 %v1795
        %v1935 = vunpack.c.h.b16 %v1795
        %v1936 = vunpack.c.l.b16 %v1796
        %v1937 = vunpack.c.h.b16 %v1796
        %v1938 = vunpack.c.l.b16 %v1797
        %v1939 = vunpack.c.h.b16 %v1797
        %v1940 = vunpack.c.l.b16 %v1798
        %v1941 = vunpack.c.h.b16 %v1798
        %v1942 = vunpack.c.l.b16 %v1799
        %v1943 = vunpack.c.h.b16 %v1799
        %v1944 = vunpack.c.l.b16 %v1800
        %v1945 = vunpack.c.h.b16 %v1800
        %v1946 = vunpack.c.l.b16 %v1801
        %v1947 = vunpack.c.h.b16 %v1801
        %v1948 = vunpack.c.l.b16 %v1802
        %v1949 = vunpack.c.h.b16 %v1802
        %v1950 = vunpack.c.l.b16 %v1803
        %v1951 = vunpack.c.h.b16 %v1803
        %v1952 = vunpack.c.l.b16 %v1804
        %v1953 = vunpack.c.h.b16 %v1804
        %v1954 = vunpack.c.l.b16 %v1805
        %v1955 = vunpack.c.h.b16 %v1805
        %v1956 = vunpack.c.l.b16 %v1806
        %v1957 = vunpack.c.h.b16 %v1806
        %v1958 = vunpack.c.l.b16 %v1807
        %v1959 = vunpack.c.h.b16 %v1807
        %v1960 = vunpack.c.l.b16 %v1808
        %v1961 = vunpack.c.h.b16 %v1808
        %v1962 = vunpack.c.l.b16 %v1809
        %v1963 = vunpack.c.h.b16 %v1809
        %v1964 = vunpack.c.l.b16 %v1810
        %v1965 = vunpack.c.h.b16 %v1810
        %v1966 = vunpack.c.l.b16 %v1811
        %v1967 = vunpack.c.h.b16 %v1811
        %v1968 = vunpack.c.l.b16 %v1812
        %v1969 = vunpack.c.h.b16 %v1812
        %v1970 = vunpack.c.l.b16 %v1813
        %v1971 = vunpack.c.h.b16 %v1813
        %v1972 = vunpack.c.l.b16 %v1814
        %v1973 = vunpack.c.h.b16 %v1814
        %v1974 = vunpack.c.l.b16 %v1815
        %v1975 = vunpack.c.h.b16 %v1815
        %v1976 = vunpack.c.l.b16 %v1816
        %v1977 = vunpack.c.h.b16 %v1816
        %v1978 = vunpack.c.l.b16 %v1817
        %v1979 = vunpack.c.h.b16 %v1817
        %v1980 = vunpack.c.l.b16 %v1818
        %v1981 = vunpack.c.h.b16 %v1818
        %v1982 = vunpack.c.l.b16 %v1819
        %v1983 = vunpack.c.h.b16 %v1819
        %v1984 = vunpack.c.l.b16 %v1820
        %v1985 = vunpack.c.h.b16 %v1820
        %v1986 = vunpack.c.l.b16 %v1821
        %v1987 = vunpack.c.h.b16 %v1821
        %v1988 = vunpack.c.l.b16 %v1822
        %v1989 = vunpack.c.h.b16 %v1822
        %v1990 = vunpack.c.l.b16 %v1823
        %v1991 = vunpack.c.h.b16 %v1823
        %v1992 = vunpack.c.l.b16 %v1824
        %v1993 = vunpack.c.h.b16 %v1824
        %v1994 = vunpack.c.l.b16 %v1825
        %v1995 = vunpack.c.h.b16 %v1825
        %v1996 = vunpack.c.l.b16 %v1826
        %v1997 = vunpack.c.h.b16 %v1826
        %v1998 = vunpack.c.l.b16 %v1827
        %v1999 = vunpack.c.h.b16 %v1827
        %v2000 = vunpack.c.l.b16 %v1828
        %v2001 = vunpack.c.h.b16 %v1828
        %v2002 = vunpack.c.l.b16 %v1829
        %v2003 = vunpack.c.h.b16 %v1829
        %v2004 = vunpack.c.l.b16 %v1830
        %v2005 = vunpack.c.h.b16 %v1830
        %v2006 = vunpack.c.l.b16 %v1831
        %v2007 = vunpack.c.h.b16 %v1831
        %v2008 = vunpack.c.l.b16 %v1832
        %v2009 = vunpack.c.h.b16 %v1832
        %v2010 = vunpack.c.l.b16 %v1833
        %v2011 = vunpack.c.h.b16 %v1833
        %v2012 = vunpack.c.l.b16 %v1834
        %v2013 = vunpack.c.h.b16 %v1834
        %v2014 = vunpack.c.l.b16 %v1835
        %v2015 = vunpack.c.h.b16 %v1835
        %v2016 = vunpack.c.l.b16 %v1836
        %v2017 = vunpack.c.h.b16 %v1836
        %v2018 = vunpack.c.l.b16 %v1837
        %v2019 = vunpack.c.h.b16 %v1837
        %v2020 = vunpack.c.l.b16 %v1838
        %v2021 = vunpack.c.h.b16 %v1838
        %v2022 = vunpack.c.l.b16 %v1839
        %v2023 = vunpack.c.h.b16 %v1839
        %v2024 = vunpack.c.l.b16 %v1840
        %v2025 = vunpack.c.h.b16 %v1840
        %v2026 = vunpack.c.l.b16 %v1841
        %v2027 = vunpack.c.h.b16 %v1841
        %v2028 = vunpack.c.l.b16 %v1842
        %v2029 = vunpack.c.h.b16 %v1842
        %v2030 = vunpack.c.l.b16 %v1843
        %v2031 = vunpack.c.h.b16 %v1843
        %v2032 = vunpack.c.l.b16 %v1844
        %v2033 = vunpack.c.h.b16 %v1844
        %v2034 = vunpack.c.l.b16 %v1845
        %v2035 = vunpack.c.h.b16 %v1845
        %v2036 = vunpack.c.l.b16 %v1846
        %v2037 = vunpack.c.h.b16 %v1846
        %v2038 = vunpack.c.l.b16 %v1847
        %v2039 = vunpack.c.h.b16 %v1847
        %v2040 = vpack.c.b16 %v1912, %v1912
        %v2041 = vpack.c.b16 %v1913, %v1913
        %v2042 = vpack.c.b16 %v1914, %v1914
        %v2043 = vpack.c.b16 %v1915, %v1915
        %v2044 = vpack.c.b16 %v1916, %v1916
        %v2045 = vpack.c.b16 %v1917, %v1917
        %v2046 = vpack.c.b16 %v1918, %v1918
        %v2047 = vpack.c.b16 %v1919, %v1919
        %v2048 = vpack.c.b16 %v1920, %v1920
        %v2049 = vpack.c.b16 %v1921, %v1921
        %v2050 = vpack.c.b16 %v1922, %v1922
        %v2051 = vpack.c.b16 %v1923, %v1923
        %v2052 = vpack.c.b16 %v1924, %v1924
        %v2053 = vpack.c.b16 %v1925, %v1925
        %v2054 = vpack.c.b16 %v1926, %v1926
        %v2055 = vpack.c.b16 %v1927, %v1927
        %v2056 = vpack.c.b16 %v1928, %v1928
        %v2057 = vpack.c.b16 %v1929, %v1929
        %v2058 = vpack.c.b16 %v1930, %v1930
        %v2059 = vpack.c.b16 %v1931, %v1931
        %v2060 = vpack.c.b16 %v1932, %v1932
        %v2061 = vpack.c.b16 %v1933, %v1933
        %v2062 = vpack.c.b16 %v1934, %v1934
        %v2063 = vpack.c.b16 %v1935, %v1935
        %v2064 = vpack.c.b16 %v1936, %v1936
        %v2065 = vpack.c.b16 %v1937, %v1937
        %v2066 = vpack.c.b16 %v1938, %v1938
        %v2067 = vpack.c.b16 %v1939, %v1939
        %v2068 = vpack.c.b16 %v1940, %v1940
        %v2069 = vpack.c.b16 %v1941, %v1941
        %v2070 = vpack.c.b16 %v1942, %v1942
        %v2071 = vpack.c.b16 %v1943, %v1943
        %v2072 = vpack.c.b16 %v1944, %v1944
        %v2073 = vpack.c.b16 %v1945, %v1945
        %v2074 = vpack.c.b16 %v1946, %v1946
        %v2075 = vpack.c.b16 %v1947, %v1947
        %v2076 = vpack.c.b16 %v1948, %v1948
        %v2077 = vpack.c.b16 %v1949, %v1949
        %v2078 = vpack.c.b16 %v1950, %v1950
        %v2079 = vpack.c.b16 %v1951, %v1951
        %v2080 = vpack.c.b16 %v1952, %v1952
        %v2081 = vpack.c.b16 %v1953, %v1953
        %v2082 = vpack.c.b16 %v1954, %v1954
        %v2083 = vpack.c.b16 %v1955, %v1955
        %v2084 = vpack.c.b16 %v1956, %v1956
        %v2085 = vpack.c.b16 %v1957, %v1957
        %v2086 = vpack.c.b16 %v1958, %v1958
        %v2087 = vpack.c.b16 %v1959, %v1959
        %v2088 = vpack.c.b16 %v1960, %v1960
        %v2089 = vpack.c.b16 %v1961, %v1961
        %v2090 = vpack.c.b16 %v1962, %v1962
        %v2091 = vpack.c.b16 %v1963, %v1963
        %v2092 = vpack.c.b16 %v1964, %v1964
        %v2093 = vpack.c.b16 %v1965, %v1965
        %v2094 = vpack.c.b16 %v1966, %v1966
        %v2095 = vpack.c.b16 %v1967, %v1967
        %v2096 = vpack.c.b16 %v1968, %v1968
        %v2097 = vpack.c.b16 %v1969, %v1969
        %v2098 = vpack.c.b16 %v1970, %v1970
        %v2099 = vpack.c.b16 %v1971, %v1971
        %v2100 = vpack.c.b16 %v1972, %v1972
        %v2101 = vpack.c.b16 %v1973, %v1973
        %v2102 = vpack.c.b16 %v1974, %v1974
        %v2103 = vpack.c.b16 %v1975, %v1975
        %v2104 = vpack.c.b16 %v1976, %v1976
        %v2105 = vpack.c.b16 %v1977, %v1977
        %v2106 = vpack.c.b16 %v1978, %v1978
        %v2107 = vpack.c.b16 %v1979, %v1979
        %v2108 = vpack.c.b16 %v1980, %v1980
        %v2109 = vpack.c.b16 %v1981, %v1981
        %v2110 = vpack.c.b16 %v1982, %v1982
        %v2111 = vpack.c.b16 %v1983, %v1983
        %v2112 = vpack.c.b16 %v1984, %v1984
        %v2113 = vpack.c.b16 %v1985, %v1985
        %v2114 = vpack.c.b16 %v1986, %v1986
        %v2115 = vpack.c.b16 %v1987, %v1987
        %v2116 = vpack.c.b16 %v1988, %v1988
        %v2117 = vpack.c.b16 %v1989, %v1989
        %v2118 = vpack.c.b16 %v1990, %v1990
        %v2119 = vpack.c.b16 %v1991, %v1991
        %v2120 = vpack.c.b16 %v1992, %v1992
        %v2121 = vpack.c.b16 %v1993, %v1993
        %v2122 = vpack.c.b16 %v1994, %v1994
        %v2123 = vpack.c.b16 %v1995, %v1995
        %v2124 = vpack.c.b16 %v1996, %v1996
        %v2125 = vpack.c.b16 %v1997, %v1997
        %v2126 = vpack.c.b16 %v1998, %v1998
        %v2127 = vpack.c.b16 %v1999, %v1999
        %v2128 = vpack.c.b16 %v2000, %v2000
        %v2129 = vpack.c.b16 %v2001, %v2001
        %v2130 = vpack.c.b16 %v2002, %v2002
        %v2131 = vpack.c.b16 %v2003, %v2003
        %v2132 = vpack.c.b16 %v2004, %v2004
        %v2133 = vpack.c.b16 %v2005, %v2005
        %v2134 = vpack.c.b16 %v2006, %v2006
        %v2135 = vpack.c.b16 %v2007, %v2007
        %v2136 = vpack.c.b16 %v2008, %v2008
        %v2137 = vpack.c.b16 %v2009, %v2009
        %v2138 = vpack.c.b16 %v2010, %v2010
        %v2139 = vpack.c.b16 %v2011, %v2011
        %v2140 = vpack.c.b16 %v2012, %v2012
        %v2141 = vpack.c.b16 %v2013, %v2013
        %v2142 = vpack.c.b16 %v2014, %v2014
        %v2143 = vpack.c.b16 %v2015, %v2015
        %v2144 = vpack.c.b16 %v2016, %v2016
        %v2145 = vpack.c.b16 %v2017, %v2017
        %v2146 = vpack.c.b16 %v2018, %v2018
        %v2147 = vpack.c.b16 %v2019, %v2019
        %v2148 = vpack.c.b16 %v2020, %v2020
        %v2149 = vpack.c.b16 %v2021, %v2021
        %v2150 = vpack.c.b16 %v2022, %v2022
        %v2151 = vpack.c.b16 %v2023, %v2023
        %v2152 = vpack.c.b16 %v2024, %v2024
        %v2153 = vpack.c.b16 %v2025, %v2025
        %v2154 = vpack.c.b16 %v2026, %v2026
        %v2155 = vpack.c.b16 %v2027, %v2027
        %v2156 = vpack.c.b16 %v2028, %v2028
        %v2157 = vpack.c.b16 %v2029, %v2029
        %v2158 = vpack.c.b16 %v2030, %v2030
        %v2159 = vpack.c.b16 %v2031, %v2031
        %v2160 = vpack.c.b16 %v2032, %v2032
        %v2161 = vpack.c.b16 %v2033, %v2033
        %v2162 = vpack.c.b16 %v2034, %v2034
        %v2163 = vpack.c.b16 %v2035, %v2035
        %v2164 = vpack.c.b16 %v2036, %v2036
        %v2165 = vpack.c.b16 %v2037, %v2037
        %v2166 = vpack.c.b16 %v2038, %v2038
        %v2167 = vpack.c.b16 %v2039, %v2039
        %2296 = vst [vmem:[%s204] sm:$0xf] %v2040
        %2297 = vst [vmem:[%s204 + $0x4] sm:$0xf] %v2041
        %2298 = vst [vmem:[%s204 + $0x8] sm:$0xf] %v2042
        %2299 = vst [vmem:[%s204 + $0xc] sm:$0xf] %v2043
        %2300 = vst [vmem:[%s204 + $0x10] sm:$0xf] %v2044
        %2301 = vst [vmem:[%s204 + $0x14] sm:$0xf] %v2045
        %2302 = vst [vmem:[%s204 + $0x18] sm:$0xf] %v2046
        %2303 = vst [vmem:[%s204 + $0x1c] sm:$0xf] %v2047
        %2304 = vst [vmem:[%s204 + $0x20] sm:$0xf] %v2048
        %2305 = vst [vmem:[%s204 + $0x24] sm:$0xf] %v2049
        %2306 = vst [vmem:[%s204 + $0x28] sm:$0xf] %v2050
        %2307 = vst [vmem:[%s204 + $0x2c] sm:$0xf] %v2051
        %2308 = vst [vmem:[%s204 + $0x30] sm:$0xf] %v2052
        %2309 = vst [vmem:[%s204 + $0x34] sm:$0xf] %v2053
        %2310 = vst [vmem:[%s204 + $0x38] sm:$0xf] %v2054
        %2311 = vst [vmem:[%s204 + $0x3c] sm:$0xf] %v2055
        %2312 = vst [vmem:[%s204 + $0x40] sm:$0xf] %v2056
        %2313 = vst [vmem:[%s204 + $0x44] sm:$0xf] %v2057
        %2314 = vst [vmem:[%s204 + $0x48] sm:$0xf] %v2058
        %2315 = vst [vmem:[%s204 + $0x4c] sm:$0xf] %v2059
        %2316 = vst [vmem:[%s204 + $0x50] sm:$0xf] %v2060
        %2317 = vst [vmem:[%s204 + $0x54] sm:$0xf] %v2061
        %2318 = vst [vmem:[%s204 + $0x58] sm:$0xf] %v2062
        %2319 = vst [vmem:[%s204 + $0x5c] sm:$0xf] %v2063
        %2320 = vst [vmem:[%s204 + $0x60] sm:$0xf] %v2064
        %2321 = vst [vmem:[%s204 + $0x64] sm:$0xf] %v2065
        %2322 = vst [vmem:[%s204 + $0x68] sm:$0xf] %v2066
        %2323 = vst [vmem:[%s204 + $0x6c] sm:$0xf] %v2067
        %2324 = vst [vmem:[%s204 + $0x70] sm:$0xf] %v2068
        %2325 = vst [vmem:[%s204 + $0x74] sm:$0xf] %v2069
        %2326 = vst [vmem:[%s204 + $0x78] sm:$0xf] %v2070
        %2327 = vst [vmem:[%s204 + $0x7c] sm:$0xf] %v2071
        %2328 = vst [vmem:[%s204 + $0x80] sm:$0xf] %v2072
        %2329 = vst [vmem:[%s204 + $0x84] sm:$0xf] %v2073
        %2330 = vst [vmem:[%s204 + $0x88] sm:$0xf] %v2074
        %2331 = vst [vmem:[%s204 + $0x8c] sm:$0xf] %v2075
        %2332 = vst [vmem:[%s204 + $0x90] sm:$0xf] %v2076
        %2333 = vst [vmem:[%s204 + $0x94] sm:$0xf] %v2077
        %2334 = vst [vmem:[%s204 + $0x98] sm:$0xf] %v2078
        %2335 = vst [vmem:[%s204 + $0x9c] sm:$0xf] %v2079
        %2336 = vst [vmem:[%s204 + $0xa0] sm:$0xf] %v2080
        %2337 = vst [vmem:[%s204 + $0xa4] sm:$0xf] %v2081
        %2338 = vst [vmem:[%s204 + $0xa8] sm:$0xf] %v2082
        %2339 = vst [vmem:[%s204 + $0xac] sm:$0xf] %v2083
        %2340 = vst [vmem:[%s204 + $0xb0] sm:$0xf] %v2084
        %2341 = vst [vmem:[%s204 + $0xb4] sm:$0xf] %v2085
        %2342 = vst [vmem:[%s204 + $0xb8] sm:$0xf] %v2086
        %2343 = vst [vmem:[%s204 + $0xbc] sm:$0xf] %v2087
        %2344 = vst [vmem:[%s204 + $0xc0] sm:$0xf] %v2088
        %2345 = vst [vmem:[%s204 + $0xc4] sm:$0xf] %v2089
        %2346 = vst [vmem:[%s204 + $0xc8] sm:$0xf] %v2090
        %2347 = vst [vmem:[%s204 + $0xcc] sm:$0xf] %v2091
        %2348 = vst [vmem:[%s204 + $0xd0] sm:$0xf] %v2092
        %2349 = vst [vmem:[%s204 + $0xd4] sm:$0xf] %v2093
        %2350 = vst [vmem:[%s204 + $0xd8] sm:$0xf] %v2094
        %2351 = vst [vmem:[%s204 + $0xdc] sm:$0xf] %v2095
        %2352 = vst [vmem:[%s204 + $0xe0] sm:$0xf] %v2096
        %2353 = vst [vmem:[%s204 + $0xe4] sm:$0xf] %v2097
        %2354 = vst [vmem:[%s204 + $0xe8] sm:$0xf] %v2098
        %2355 = vst [vmem:[%s204 + $0xec] sm:$0xf] %v2099
        %2356 = vst [vmem:[%s204 + $0xf0] sm:$0xf] %v2100
        %2357 = vst [vmem:[%s204 + $0xf4] sm:$0xf] %v2101
        %2358 = vst [vmem:[%s204 + $0xf8] sm:$0xf] %v2102
        %2359 = vst [vmem:[%s204 + $0xfc] sm:$0xf] %v2103
        %2360 = vst [vmem:[%s204 + $0x100] sm:$0xf] %v2104
        %2361 = vst [vmem:[%s204 + $0x104] sm:$0xf] %v2105
        %2362 = vst [vmem:[%s204 + $0x108] sm:$0xf] %v2106
        %2363 = vst [vmem:[%s204 + $0x10c] sm:$0xf] %v2107
        %2364 = vst [vmem:[%s204 + $0x110] sm:$0xf] %v2108
        %2365 = vst [vmem:[%s204 + $0x114] sm:$0xf] %v2109
        %2366 = vst [vmem:[%s204 + $0x118] sm:$0xf] %v2110
        %2367 = vst [vmem:[%s204 + $0x11c] sm:$0xf] %v2111
        %2368 = vst [vmem:[%s204 + $0x120] sm:$0xf] %v2112
        %2369 = vst [vmem:[%s204 + $0x124] sm:$0xf] %v2113
        %2370 = vst [vmem:[%s204 + $0x128] sm:$0xf] %v2114
        %2371 = vst [vmem:[%s204 + $0x12c] sm:$0xf] %v2115
        %2372 = vst [vmem:[%s204 + $0x130] sm:$0xf] %v2116
        %2373 = vst [vmem:[%s204 + $0x134] sm:$0xf] %v2117
        %2374 = vst [vmem:[%s204 + $0x138] sm:$0xf] %v2118
        %2375 = vst [vmem:[%s204 + $0x13c] sm:$0xf] %v2119
        %2376 = vst [vmem:[%s204 + $0x140] sm:$0xf] %v2120
        %2377 = vst [vmem:[%s204 + $0x144] sm:$0xf] %v2121
        %2378 = vst [vmem:[%s204 + $0x148] sm:$0xf] %v2122
        %2379 = vst [vmem:[%s204 + $0x14c] sm:$0xf] %v2123
        %2380 = vst [vmem:[%s204 + $0x150] sm:$0xf] %v2124
        %2381 = vst [vmem:[%s204 + $0x154] sm:$0xf] %v2125
        %2382 = vst [vmem:[%s204 + $0x158] sm:$0xf] %v2126
        %2383 = vst [vmem:[%s204 + $0x15c] sm:$0xf] %v2127
        %2384 = vst [vmem:[%s204 + $0x160] sm:$0xf] %v2128
        %2385 = vst [vmem:[%s204 + $0x164] sm:$0xf] %v2129
        %2386 = vst [vmem:[%s204 + $0x168] sm:$0xf] %v2130
        %2387 = vst [vmem:[%s204 + $0x16c] sm:$0xf] %v2131
        %2388 = vst [vmem:[%s204 + $0x170] sm:$0xf] %v2132
        %2389 = vst [vmem:[%s204 + $0x174] sm:$0xf] %v2133
        %2390 = vst [vmem:[%s204 + $0x178] sm:$0xf] %v2134
        %2391 = vst [vmem:[%s204 + $0x17c] sm:$0xf] %v2135
        %2392 = vst [vmem:[%s204 + $0x180] sm:$0xf] %v2136
        %2393 = vst [vmem:[%s204 + $0x184] sm:$0xf] %v2137
        %2394 = vst [vmem:[%s204 + $0x188] sm:$0xf] %v2138
        %2395 = vst [vmem:[%s204 + $0x18c] sm:$0xf] %v2139
        %2396 = vst [vmem:[%s204 + $0x190] sm:$0xf] %v2140
        %2397 = vst [vmem:[%s204 + $0x194] sm:$0xf] %v2141
        %2398 = vst [vmem:[%s204 + $0x198] sm:$0xf] %v2142
        %2399 = vst [vmem:[%s204 + $0x19c] sm:$0xf] %v2143
        %2400 = vst [vmem:[%s204 + $0x1a0] sm:$0xf] %v2144
        %2401 = vst [vmem:[%s204 + $0x1a4] sm:$0xf] %v2145
        %2402 = vst [vmem:[%s204 + $0x1a8] sm:$0xf] %v2146
        %2403 = vst [vmem:[%s204 + $0x1ac] sm:$0xf] %v2147
        %2404 = vst [vmem:[%s204 + $0x1b0] sm:$0xf] %v2148
        %2405 = vst [vmem:[%s204 + $0x1b4] sm:$0xf] %v2149
        %2406 = vst [vmem:[%s204 + $0x1b8] sm:$0xf] %v2150
        %2407 = vst [vmem:[%s204 + $0x1bc] sm:$0xf] %v2151
        %2408 = vst [vmem:[%s204 + $0x1c0] sm:$0xf] %v2152
        %2409 = vst [vmem:[%s204 + $0x1c4] sm:$0xf] %v2153
        %2410 = vst [vmem:[%s204 + $0x1c8] sm:$0xf] %v2154
        %2411 = vst [vmem:[%s204 + $0x1cc] sm:$0xf] %v2155
        %2412 = vst [vmem:[%s204 + $0x1d0] sm:$0xf] %v2156
        %2413 = vst [vmem:[%s204 + $0x1d4] sm:$0xf] %v2157
        %2414 = vst [vmem:[%s204 + $0x1d8] sm:$0xf] %v2158
        %2415 = vst [vmem:[%s204 + $0x1dc] sm:$0xf] %v2159
        %2416 = vst [vmem:[%s204 + $0x1e0] sm:$0xf] %v2160
        %2417 = vst [vmem:[%s204 + $0x1e4] sm:$0xf] %v2161
        %2418 = vst [vmem:[%s204 + $0x1e8] sm:$0xf] %v2162
        %2419 = vst [vmem:[%s204 + $0x1ec] sm:$0xf] %v2163
        %2420 = vst [vmem:[%s204 + $0x1f0] sm:$0xf] %v2164
        %2421 = vst [vmem:[%s204 + $0x1f4] sm:$0xf] %v2165
        %2422 = vst [vmem:[%s204 + $0x1f8] sm:$0xf] %v2166
        %2423 = vst [vmem:[%s204 + $0x1fc] sm:$0xf] %v2167
        %s2424 = sand.u32 %s97, 1
        %s2425 = scalar_lea.sflag [#allocation4], %s2424
        %s2426 = sand.u32 %s97, 1
        %s2427 = smul.addr %s2426, 512
        %s2428 = scalar_lea.vmem [#allocation7], %s2427
        // Predicated region
        $region41: #{gemm_bias_act.1} parent=31 // pred_check
          %p2429 = pneg %p107
        $region42: #{gemm_bias_act.1} parent=31 // pred_check_branch
          %2431 = sbr.rel (%p2429) target = $region44
        $region43: #{gemm_bias_act.1} parent=31 // pred_region
          %s2432 = smul.u32 128, %s21
          %s2434 = ssub.s32 8192, 8192
          %2435 = vsyncadd %s2425, %s2434
          %s2436 = smul.addr %s2432, 64
          %s2437 = scalar_lea.hbm %s3, %s2436
          %s2438 = sshll.u32 %s2428, 4
          %s2439 = int_to_ptr.vmem [resolvable:$true] %s2438
          %2444 = dma.vmem_to_hbm [thread:$0]  %s2439, 8192, %s2437, %s2425, 64, 64, 4
        $region44: #{gemm_bias_act.1} parent=31 // pred_fallthru
          _
      $region32: #{gemm_bias_act.1} parent=5 // pred_fallthru
        _
      %p2445 = scmp.le.s32.totalorder 2, %s16
      // Predicated region
      $region45: #{gemm_bias_act.1} parent=5 // pred_check
        %p2446 = pneg %p2445
      $region46: #{gemm_bias_act.1} parent=5 // pred_check_branch
        %2448 = sbr.rel (%p2446) target = $region48
      $region47: #{gemm_bias_act.1} parent=5 // pred_region
        %s2449 = ssub.s32 %s16, 2
        // Predicated region
        $region49: #{gemm_bias_act.1} parent=47 // pred_check
          %p2450 = pneg %p113
        $region50: #{gemm_bias_act.1} parent=47 // pred_check_branch
          %2452 = sbr.rel (%p2450) target = $region52
        $region51: #{gemm_bias_act.1} parent=47 // pred_region
          %s2453 = sand.u32 %s98, 1
          %s2454 = scalar_lea.sflag [#allocation4], %s2453
          %s2455 = sand.u32 %s98, 1
          %s2456 = smul.addr %s2455, 512
          %s2457 = scalar_lea.vmem [#allocation7], %s2456
          %2458 = dma.done %s2454, 8192
        $region52: #{gemm_bias_act.1} parent=47 // pred_fallthru
          _
      $region48: #{gemm_bias_act.1} parent=5 // pred_fallthru
        _
    $region6: #{gemm_bias_act.1} parent=1 // loop_footer
      %s20 = sadd.s32 1, %s16
    $region7: #{gemm_bias_act.1} parent=1 // loop_footer_branch
      %15 = sbr.rel target = $region3
    $region8: #{gemm_bias_act.1} parent=1 // loop_exit
      _
    %2459 = vsyncpa [#allocation3], 1
    %s2460 = scalar_lea.sflag [#allocation3], 1
    %2461 = vsyncpa %s2460, 1
    %2462 = vsyncpa [#allocation6], 1
    %2463 = vsyncpa [#allocation4], 1
    %s2464 = scalar_lea.sflag [#allocation4], 1
    %2465 = vsyncpa %s2464, 1

</llo_original>
